<compile_context>
chip_gen: v5e
topology: v5e:2x2
jax: 0.10.0
libtpu: 0.0.40
codegen_flags: <defaults>
</compile_context>

<pallas_src>
import functools
import math

import jax
import jax.numpy as jnp
from jax import lax
from jax.experimental import pallas as pl
from jax.experimental.pallas import tpu as pltpu

_LANE = 128


def _round_up(n, m):
    return ((n + m - 1) // m) * m


def _choose_tile(n, target):
    """Largest multiple-of-8 divisor of n that is <= target (else full n)."""
    if n <= target:
        return n
    for t in range(target, 7, -8):
        if n % t == 0:
            return t
    return n


# ----------------------------------------------------------------------------
# Kernel: one (batch, q-tile, kv-tile) grid step.
# ----------------------------------------------------------------------------
def _mha_flash_kernel(xq_ref, xkv_ref, wq_ref, wkv_ref, wp_ref, bp_ref,
                      o_ref, q_sc, m_sc, l_sc, acc_sc, *, n_head, hs_pad):
    # xq_ref  : (1, tq, Cp)    q-side tokens for this q tile
    # xkv_ref : (1, tk, Cp)    kv-side tokens for this kv tile
    # wq_ref  : (Cp, H*hsp)    packed per-head Q weights, scale folded in
    # wkv_ref : (Cp, 2*H*hsp)  packed per-head [K | V] weights
    # wp_ref  : (H*hsp, Cp)    packed output-projection weight
    # bp_ref  : (1, Cp)        output-projection bias
    # o_ref   : (1, tq, Cp)    lane-dense output slab
    # q_sc    : (tq, H*hsp)    Q projection for the current (b, qi) block
    # m_sc    : (H, tq, 1)     running row max      (online softmax)
    # l_sc    : (H, tq, 1)     running denominator  (online softmax)
    # acc_sc  : (H, tq, hsp)   per-head weighted-V accumulator
    ki = pl.program_id(2)
    n_kv = pl.num_programs(2)
    hd = n_head * hs_pad

    @pl.when(ki == 0)
    def _init():
        # All heads' Q projection in one wide lane-dense matmul (scale folded).
        q_sc[...] = jnp.dot(xq_ref[0], wq_ref[...],
                            preferred_element_type=jnp.float32
                            ).astype(q_sc.dtype)
        m_sc[...] = jnp.full(m_sc.shape, -jnp.inf, dtype=m_sc.dtype)
        l_sc[...] = jnp.zeros(l_sc.shape, dtype=l_sc.dtype)
        acc_sc[...] = jnp.zeros(acc_sc.shape, dtype=acc_sc.dtype)

    # K/V projection for this kv tile (all heads, one wide matmul).
    kv = jnp.dot(xkv_ref[0], wkv_ref[...],
                 preferred_element_type=jnp.float32).astype(xkv_ref.dtype)

    # TODO(synk): for large n_head switch to lax.fori_loop(unroll=True) with
    # pl.multiple_of(h * hs_pad, 128) slice starts to bound live ranges.
    for h in range(n_head):                       # small H: static unroll
        lo = h * hs_pad
        q_h = q_sc[:, lo:lo + hs_pad]             # (tq, hsp), aligned view
        k_h = kv[:, lo:lo + hs_pad]               # (tk, hsp)
        v_h = kv[:, hd + lo:hd + lo + hs_pad]     # (tk, hsp)

        # scores = q @ k^T without materializing a transpose of k.
        s = lax.dot_general(q_h, k_h, (((1,), (1,)), ((), ())),
                            preferred_element_type=jnp.float32)   # (tq, tk)

        m_prev = m_sc[h]
        m_new = jnp.maximum(m_prev, jnp.max(s, axis=-1, keepdims=True))
        alpha = jnp.exp(m_prev - m_new)
        p = jnp.exp(s - m_new)
        # TODO(synk): attention-weight dropout is identity (eval mode).
        l_sc[h] = alpha * l_sc[h] + jnp.sum(p, axis=-1, keepdims=True)
        acc_sc[h] = alpha * acc_sc[h] + jnp.dot(
            p.astype(v_h.dtype), v_h, preferred_element_type=jnp.float32)
        m_sc[h] = m_new

    @pl.when(ki == n_kv - 1)
    def _finalize():
        # Fused output projection accumulated per head (no lane-boundary
        # concat). Exact division — runs once per output tile only.
        y = bp_ref[...].astype(jnp.float32)                       # (1, Cp)
        for h in range(n_head):
            lo = h * hs_pad
            head_out = acc_sc[h] / l_sc[h]                        # (tq, hsp)
            y = y + jnp.dot(head_out.astype(wp_ref.dtype),
                            wp_ref[lo:lo + hs_pad, :],
                            preferred_element_type=jnp.float32)
        # TODO(synk): final output dropout is identity (eval mode).
        o_ref[0] = y.astype(o_ref.dtype)


# ----------------------------------------------------------------------------
# Wrapper: lane-pad + pack weights, launch (B, q-tiles, kv-tiles) grid.
# ----------------------------------------------------------------------------
def multi_head_attention(x, params, *, q_tile=256, kv_tile=256):
    """x: (B, T, C); params: wq/wk/wv (H, C, hs), wp (C, C), bp (1, C)."""
    B, T, C = x.shape
    wq, wk, wv = params["wq"], params["wk"], params["wv"]
    wp, bp = params["wp"], params["bp"]
    H, _, hs = wq.shape
    scale = 1.0 / math.sqrt(hs)
    dtype = x.dtype

    hs_pad = _round_up(hs, _LANE)   # per-head lane padding -> aligned slices
    c_pad = _round_up(C, _LANE)     # lane-dense input/output slabs
    tq = _choose_tile(T, q_tile)
    tk = _choose_tile(T, kv_tile)

    def pack_in(w):
        # (H, C, hs) -> (Cp, H*hsp); head h occupies columns
        # [h*hsp, h*hsp + hs), zero-padded to the 128-lane boundary.
        w = jnp.pad(w, ((0, 0), (0, c_pad - C), (0, hs_pad - hs)))
        return jnp.transpose(w, (1, 0, 2)).reshape(c_pad, H * hs_pad)

    # Fold 1/sqrt(hs) into the packed Q weights (zero kernel cost).
    w_q = (pack_in(wq) * scale).astype(dtype)                    # (Cp, H*hsp)
    w_kv = jnp.concatenate([pack_in(wk), pack_in(wv)],
                           axis=-1).astype(dtype)                # (Cp, 2*H*hsp)

    # Output projection: pad each head's row block to hs_pad rows.
    wp_heads = jnp.pad(wp.reshape(H, hs, C),
                       ((0, 0), (0, hs_pad - hs), (0, c_pad - C)))
    w_p = wp_heads.reshape(H * hs_pad, c_pad).astype(dtype)      # (H*hsp, Cp)
    b_p = jnp.pad(bp, ((0, 0), (0, c_pad - C))).astype(dtype)    # (1, Cp)

    x_p = jnp.pad(x, ((0, 0), (0, 0), (0, c_pad - C))) if c_pad != C else x

    kernel = functools.partial(_mha_flash_kernel, n_head=H, hs_pad=hs_pad)
    grid = (B, T // tq, T // tk)

    # VMEM budget: resident single-buffered weights + double-buffered x/out
    # tiles + online-softmax scratch + in-flight temporaries, 2x headroom.
    isz = jnp.dtype(dtype).itemsize
    resident = (w_q.size + w_kv.size + w_p.size + b_p.size) * isz
    pipelined = 2 * (tq * c_pad + tk * c_pad + tq * c_pad) * isz
    scratch = (tq * H * hs_pad * isz + H * tq * hs_pad * 4
               + 2 * H * tq * _LANE * 4)
    temps = tk * 2 * H * hs_pad * 4 + 2 * tq * tk * 4 + tq * c_pad * 4
    vmem_limit = int(min(64 * 1024 * 1024,
                         max(2 * (resident + pipelined + scratch + temps),
                             16 * 1024 * 1024)))

    cost = pl.CostEstimate(
        flops=(2 * B * T * C * 3 * C + 4 * B * H * T * T * hs
               + 2 * B * T * C * C),
        transcendentals=B * H * T * T,
        bytes_accessed=((x.size + B * T * C) * isz
                        + (w_q.size + w_kv.size + w_p.size + b_p.size) * isz),
    )

    out = pl.pallas_call(
        kernel,
        out_shape=jax.ShapeDtypeStruct((B, T, c_pad), dtype),
        grid_spec=pltpu.PrefetchScalarGridSpec(
            num_scalar_prefetch=0,
            grid=grid,
            in_specs=[
                # x for the Q side (q-tile) and for the K/V side (kv-tile).
                pl.BlockSpec((1, tq, c_pad), lambda b, qi, ki: (b, qi, 0)),
                pl.BlockSpec((1, tk, c_pad), lambda b, qi, ki: (b, ki, 0)),
                # Resident weights: constant index -> single-buffered.
                pl.BlockSpec((c_pad, H * hs_pad), lambda b, qi, ki: (0, 0),
                             pipeline_mode=pl.Buffered(1)),
                pl.BlockSpec((c_pad, 2 * H * hs_pad), lambda b, qi, ki: (0, 0),
                             pipeline_mode=pl.Buffered(1)),
                pl.BlockSpec((H * hs_pad, c_pad), lambda b, qi, ki: (0, 0),
                             pipeline_mode=pl.Buffered(1)),
                pl.BlockSpec((1, c_pad), lambda b, qi, ki: (0, 0),
                             pipeline_mode=pl.Buffered(1)),
            ],
            out_specs=pl.BlockSpec((1, tq, c_pad),
                                   lambda b, qi, ki: (b, qi, 0)),
            scratch_shapes=[
                pltpu.VMEM((tq, H * hs_pad), dtype),        # Q projection
                pltpu.VMEM((H, tq, 1), jnp.float32),        # running max
                pltpu.VMEM((H, tq, 1), jnp.float32),        # running denom
                pltpu.VMEM((H, tq, hs_pad), jnp.float32),   # per-head acc
            ],
        ),
        compiler_params=pltpu.CompilerParams(
            dimension_semantics=("parallel", "parallel", "arbitrary"),
            vmem_limit_bytes=vmem_limit,
        ),
        cost_estimate=cost,
    )(x_p, x_p, w_q, w_kv, w_p, b_p)

    return out[..., :C] if c_pad != C else out


# ----------------------------------------------------------------------------
# Pure-JAX reference (mirrors the PyTorch module exactly).
# ----------------------------------------------------------------------------
def reference(x, params):
    n_head, _, hs = params["wq"].shape
    outs = []
    for h in range(n_head):
        q = x @ params["wq"][h]
        k = x @ params["wk"][h]
        v = x @ params["wv"][h]
        wei = (q @ jnp.swapaxes(k, -2, -1)) * (hs ** -0.5)
        wei = jax.nn.softmax(wei, axis=-1)
        outs.append(wei @ v)
    cat = jnp.concatenate(outs, axis=-1)
    return cat @ params["wp"] + params["bp"][0]


if __name__ == "__main__":
    # Config: n_embd=32, n_head=4 => head_size=8 ; batch=2, seq=8
    B, T, C, n_head = 2, 8, 32, 4
    hs = C // n_head

    key = jax.random.PRNGKey(0)
    k_x, k_q, k_k, k_v, k_p, k_b = jax.random.split(key, 6)

    x = jax.random.normal(k_x, (B, T, C), dtype=jnp.float32)
    params = {
        "wq": jax.random.normal(k_q, (n_head, C, hs), dtype=jnp.float32) * 0.1,
        "wk": jax.random.normal(k_k, (n_head, C, hs), dtype=jnp.float32) * 0.1,
        "wv": jax.random.normal(k_v, (n_head, C, hs), dtype=jnp.float32) * 0.1,
        "wp": jax.random.normal(k_p, (C, C), dtype=jnp.float32) * 0.1,
        "bp": jax.random.normal(k_b, (1, C), dtype=jnp.float32) * 0.1,
    }

    out = jax.block_until_ready(jax.jit(multi_head_attention)(x, params))
    ref = reference(x, params)

    assert out.shape == (B, T, C), out.shape
    assert jnp.allclose(out, ref, atol=2e-3, rtol=2e-3), \
        float(jnp.max(jnp.abs(out - ref)))

    print("KERNEL_OK")
</pallas_src>

<mosaic_0001>
module attributes {stable_mosaic.version = 11 : i64} {
  func.func @_mha_flash_kernel(%arg0: i32, %arg1: i32, %arg2: i32, %arg3: memref<1x8x128xf32, #tpu.memory_space<vmem>>, %arg4: memref<1x8x128xf32, #tpu.memory_space<vmem>>, %arg5: memref<128x512xf32, #tpu.memory_space<vmem>>, %arg6: memref<128x1024xf32, #tpu.memory_space<vmem>>, %arg7: memref<512x128xf32, #tpu.memory_space<vmem>>, %arg8: memref<1x128xf32, #tpu.memory_space<vmem>>, %arg9: memref<1x8x128xf32, #tpu.memory_space<vmem>>, %arg10: memref<8x512xf32, #tpu.memory_space<vmem>>, %arg11: memref<4x8x1xf32, #tpu.memory_space<vmem>>, %arg12: memref<4x8x1xf32, #tpu.memory_space<vmem>>, %arg13: memref<4x8x128xf32, #tpu.memory_space<vmem>>) attributes {dimension_semantics = [#tpu.dimension_semantics<parallel>, #tpu.dimension_semantics<parallel>, #tpu.dimension_semantics<arbitrary>], iteration_bounds = array<i64: 2, 1, 1>, scalar_prefetch = 0 : i64, scratch_operands = 4 : i64, tpu.core_type = #tpu.core_type<tc>, window_params = [{transform_indices = @transform_0, window_bounds = array<i64: 1, 8, 128>}, {transform_indices = @transform_1, window_bounds = array<i64: 1, 8, 128>}, {pipeline_mode = #tpu.pipeline_mode<synchronous>, transform_indices = @transform_2, window_bounds = array<i64: 128, 512>}, {pipeline_mode = #tpu.pipeline_mode<synchronous>, transform_indices = @transform_3, window_bounds = array<i64: 128, 1024>}, {pipeline_mode = #tpu.pipeline_mode<synchronous>, transform_indices = @transform_4, window_bounds = array<i64: 512, 128>}, {pipeline_mode = #tpu.pipeline_mode<synchronous>, transform_indices = @transform_5, window_bounds = array<i64: 1, 128>}, {transform_indices = @transform_6, window_bounds = array<i64: 1, 8, 128>}]} {
    %c0_i32 = arith.constant 0 : i32
    %0 = arith.cmpi eq, %arg2, %c0_i32 : i32
    %1 = arith.extui %0 : i1 to i32
    %c0_i32_0 = arith.constant 0 : i32
    %2 = arith.cmpi ne, %1, %c0_i32_0 : i32
    scf.if %2 {
      %c0_97 = arith.constant 0 : index
      %c0_98 = arith.constant 0 : index
      %c0_99 = arith.constant 0 : index
      %150 = vector.load %arg3[%c0_97, %c0_98, %c0_99] : memref<1x8x128xf32, #tpu.memory_space<vmem>>, vector<1x8x128xf32>
      %151 = vector.shape_cast %150 : vector<1x8x128xf32> to vector<8x128xf32>
      %c0_100 = arith.constant 0 : index
      %c0_101 = arith.constant 0 : index
      %152 = vector.load %arg5[%c0_100, %c0_101] : memref<128x512xf32, #tpu.memory_space<vmem>>, vector<128x512xf32>
      %cst_102 = arith.constant dense<0.000000e+00> : vector<8x512xf32>
      %153 = tpu.matmul %151, %152, %cst_102 {dimension_numbers = #tpu.dot_dimension_numbers<[1], [0], [0], [1], [0, 0, 1, 1], [], []>} : vector<8x128xf32>, vector<128x512xf32>, vector<8x512xf32> -> vector<8x512xf32>
      %c0_103 = arith.constant 0 : index
      %c0_104 = arith.constant 0 : index
      %154 = vector.load %arg10[%c0_103, %c0_104] : memref<8x512xf32, #tpu.memory_space<vmem>>, vector<8x512xf32>
      tpu.vector_store %arg10[%c0_103, %c0_104], %153 {strides = array<i32>} : memref<8x512xf32, #tpu.memory_space<vmem>>, vector<8x512xf32>,
      %cst_105 = arith.constant 0xFF800000 : f32
      %155 = vector.broadcast %cst_105 : f32 to vector<4x8x1xf32>
      %c0_106 = arith.constant 0 : index
      %c0_107 = arith.constant 0 : index
      %c0_108 = arith.constant 0 : index
      %156 = vector.load %arg11[%c0_106, %c0_107, %c0_108] : memref<4x8x1xf32, #tpu.memory_space<vmem>>, vector<4x8x1xf32>
      tpu.vector_store %arg11[%c0_106, %c0_107, %c0_108], %155 {strides = array<i32>} : memref<4x8x1xf32, #tpu.memory_space<vmem>>, vector<4x8x1xf32>,
      %cst_109 = arith.constant 0.000000e+00 : f32
      %157 = vector.broadcast %cst_109 : f32 to vector<4x8x1xf32>
      %c0_110 = arith.constant 0 : index
      %c0_111 = arith.constant 0 : index
      %c0_112 = arith.constant 0 : index
      %158 = vector.load %arg12[%c0_110, %c0_111, %c0_112] : memref<4x8x1xf32, #tpu.memory_space<vmem>>, vector<4x8x1xf32>
      tpu.vector_store %arg12[%c0_110, %c0_111, %c0_112], %157 {strides = array<i32>} : memref<4x8x1xf32, #tpu.memory_space<vmem>>, vector<4x8x1xf32>,
      %cst_113 = arith.constant 0.000000e+00 : f32
      %159 = vector.broadcast %cst_113 : f32 to vector<4x8x128xf32>
      %c0_114 = arith.constant 0 : index
      %c0_115 = arith.constant 0 : index
      %c0_116 = arith.constant 0 : index
      %160 = vector.load %arg13[%c0_114, %c0_115, %c0_116] : memref<4x8x128xf32, #tpu.memory_space<vmem>>, vector<4x8x128xf32>
      tpu.vector_store %arg13[%c0_114, %c0_115, %c0_116], %159 {strides = array<i32>} : memref<4x8x128xf32, #tpu.memory_space<vmem>>, vector<4x8x128xf32>,
    } else {
    }
    %c0 = arith.constant 0 : index
    %c0_1 = arith.constant 0 : index
    %c0_2 = arith.constant 0 : index
    %3 = vector.load %arg4[%c0, %c0_1, %c0_2] : memref<1x8x128xf32, #tpu.memory_space<vmem>>, vector<1x8x128xf32>
    %4 = vector.shape_cast %3 : vector<1x8x128xf32> to vector<8x128xf32>
    %c0_3 = arith.constant 0 : index
    %c0_4 = arith.constant 0 : index
    %5 = vector.load %arg6[%c0_3, %c0_4] : memref<128x1024xf32, #tpu.memory_space<vmem>>, vector<128x1024xf32>
    %cst = arith.constant dense<0.000000e+00> : vector<8x1024xf32>
    %6 = tpu.matmul %4, %5, %cst {dimension_numbers = #tpu.dot_dimension_numbers<[1], [0], [0], [1], [0, 0, 1, 1], [], []>} : vector<8x128xf32>, vector<128x1024xf32>, vector<8x1024xf32> -> vector<8x1024xf32>
    %c0_5 = arith.constant 0 : index
    %c0_6 = arith.constant 0 : index
    %7 = vector.load %arg10[%c0_5, %c0_6] : memref<8x512xf32, #tpu.memory_space<vmem>>, vector<8x128xf32>
    %8 = vector.extract_strided_slice %6 {offsets = [0, 0], sizes = [8, 128], strides = [1, 1]} : vector<8x1024xf32> to vector<8x128xf32>
    %9 = vector.extract_strided_slice %6 {offsets = [0, 512], sizes = [8, 128], strides = [1, 1]} : vector<8x1024xf32> to vector<8x128xf32>
    %cst_7 = arith.constant dense<0.000000e+00> : vector<8x8xf32>
    %10 = tpu.matmul %7, %8, %cst_7 {dimension_numbers = #tpu.dot_dimension_numbers<[1], [1], [0], [0], [0, 0, 1, 0], [], []>} : vector<8x128xf32>, vector<8x128xf32>, vector<8x8xf32> -> vector<8x8xf32>
    %c0_8 = arith.constant 0 : index
    %c0_9 = arith.constant 0 : index
    %c0_10 = arith.constant 0 : index
    %11 = vector.load %arg11[%c0_8, %c0_9, %c0_10] : memref<4x8x1xf32, #tpu.memory_space<vmem>>, vector<1x8x1xf32>
    %12 = vector.shape_cast %11 : vector<1x8x1xf32> to vector<8x1xf32>
    %cst_11 = arith.constant dense<0xFF800000> : vector<8xf32>
    %13 = vector.multi_reduction <maximumf>, %10, %cst_11 [1] : vector<8x8xf32> to vector<8xf32>
    %14 = vector.shape_cast %13 : vector<8xf32> to vector<8x1xf32>
    %15 = arith.maximumf %12, %14 : vector<8x1xf32>
    %16 = arith.subf %12, %15 : vector<8x1xf32>
    %17 = math.exp %16 : vector<8x1xf32>
    %18 = vector.broadcast %15 : vector<8x1xf32> to vector<8x8xf32>
    %19 = arith.subf %10, %18 : vector<8x8xf32>
    %20 = math.exp %19 : vector<8x8xf32>
    %c0_12 = arith.constant 0 : index
    %c0_13 = arith.constant 0 : index
    %c0_14 = arith.constant 0 : index
    %21 = vector.load %arg12[%c0_12, %c0_13, %c0_14] : memref<4x8x1xf32, #tpu.memory_space<vmem>>, vector<1x8x1xf32>
    %22 = vector.shape_cast %21 : vector<1x8x1xf32> to vector<8x1xf32>
    %23 = arith.mulf %17, %22 : vector<8x1xf32>
    %cst_15 = arith.constant dense<0.000000e+00> : vector<8xf32>
    %24 = vector.multi_reduction <add>, %20, %cst_15 [1] : vector<8x8xf32> to vector<8xf32>
    %25 = vector.shape_cast %24 : vector<8xf32> to vector<8x1xf32>
    %26 = arith.addf %23, %25 : vector<8x1xf32>
    %c0_16 = arith.constant 0 : index
    %c0_17 = arith.constant 0 : index
    %c0_18 = arith.constant 0 : index
    %27 = vector.load %arg12[%c0_16, %c0_17, %c0_18] : memref<4x8x1xf32, #tpu.memory_space<vmem>>, vector<1x8x1xf32>
    %28 = vector.shape_cast %27 : vector<1x8x1xf32> to vector<8x1xf32>
    %29 = vector.shape_cast %26 : vector<8x1xf32> to vector<1x8x1xf32>
    tpu.vector_store %arg12[%c0_16, %c0_17, %c0_18], %29 {strides = array<i32>} : memref<4x8x1xf32, #tpu.memory_space<vmem>>, vector<1x8x1xf32>,
    %c0_19 = arith.constant 0 : index
    %c0_20 = arith.constant 0 : index
    %c0_21 = arith.constant 0 : index
    %30 = vector.load %arg13[%c0_19, %c0_20, %c0_21] : memref<4x8x128xf32, #tpu.memory_space<vmem>>, vector<1x8x128xf32>
    %31 = vector.shape_cast %30 : vector<1x8x128xf32> to vector<8x128xf32>
    %32 = vector.broadcast %17 : vector<8x1xf32> to vector<8x128xf32>
    %33 = arith.mulf %32, %31 : vector<8x128xf32>
    %cst_22 = arith.constant dense<0.000000e+00> : vector<8x128xf32>
    %34 = tpu.matmul %20, %9, %cst_22 {dimension_numbers = #tpu.dot_dimension_numbers<[1], [0], [0], [1], [0, 0, 1, 1], [], []>} : vector<8x8xf32>, vector<8x128xf32>, vector<8x128xf32> -> vector<8x128xf32>
    %35 = arith.addf %33, %34 : vector<8x128xf32>
    %c0_23 = arith.constant 0 : index
    %c0_24 = arith.constant 0 : index
    %c0_25 = arith.constant 0 : index
    %36 = vector.load %arg13[%c0_23, %c0_24, %c0_25] : memref<4x8x128xf32, #tpu.memory_space<vmem>>, vector<1x8x128xf32>
    %37 = vector.shape_cast %36 : vector<1x8x128xf32> to vector<8x128xf32>
    %38 = vector.shape_cast %35 : vector<8x128xf32> to vector<1x8x128xf32>
    tpu.vector_store %arg13[%c0_23, %c0_24, %c0_25], %38 {strides = array<i32>} : memref<4x8x128xf32, #tpu.memory_space<vmem>>, vector<1x8x128xf32>,
    %c0_26 = arith.constant 0 : index
    %c0_27 = arith.constant 0 : index
    %c0_28 = arith.constant 0 : index
    %39 = vector.load %arg11[%c0_26, %c0_27, %c0_28] : memref<4x8x1xf32, #tpu.memory_space<vmem>>, vector<1x8x1xf32>
    %40 = vector.shape_cast %39 : vector<1x8x1xf32> to vector<8x1xf32>
    %41 = vector.shape_cast %15 : vector<8x1xf32> to vector<1x8x1xf32>
    tpu.vector_store %arg11[%c0_26, %c0_27, %c0_28], %41 {strides = array<i32>} : memref<4x8x1xf32, #tpu.memory_space<vmem>>, vector<1x8x1xf32>,
    %c0_29 = arith.constant 0 : index
    %c128 = arith.constant 128 : index
    %42 = vector.load %arg10[%c0_29, %c128] : memref<8x512xf32, #tpu.memory_space<vmem>>, vector<8x128xf32>
    %43 = vector.extract_strided_slice %6 {offsets = [0, 128], sizes = [8, 128], strides = [1, 1]} : vector<8x1024xf32> to vector<8x128xf32>
    %44 = vector.extract_strided_slice %6 {offsets = [0, 640], sizes = [8, 128], strides = [1, 1]} : vector<8x1024xf32> to vector<8x128xf32>
    %cst_30 = arith.constant dense<0.000000e+00> : vector<8x8xf32>
    %45 = tpu.matmul %42, %43, %cst_30 {dimension_numbers = #tpu.dot_dimension_numbers<[1], [1], [0], [0], [0, 0, 1, 0], [], []>} : vector<8x128xf32>, vector<8x128xf32>, vector<8x8xf32> -> vector<8x8xf32>
    %c1 = arith.constant 1 : index
    %c0_31 = arith.constant 0 : index
    %c0_32 = arith.constant 0 : index
    %46 = vector.load %arg11[%c1, %c0_31, %c0_32] : memref<4x8x1xf32, #tpu.memory_space<vmem>>, vector<1x8x1xf32>
    %47 = vector.shape_cast %46 : vector<1x8x1xf32> to vector<8x1xf32>
    %cst_33 = arith.constant dense<0xFF800000> : vector<8xf32>
    %48 = vector.multi_reduction <maximumf>, %45, %cst_33 [1] : vector<8x8xf32> to vector<8xf32>
    %49 = vector.shape_cast %48 : vector<8xf32> to vector<8x1xf32>
    %50 = arith.maximumf %47, %49 : vector<8x1xf32>
    %51 = arith.subf %47, %50 : vector<8x1xf32>
    %52 = math.exp %51 : vector<8x1xf32>
    %53 = vector.broadcast %50 : vector<8x1xf32> to vector<8x8xf32>
    %54 = arith.subf %45, %53 : vector<8x8xf32>
    %55 = math.exp %54 : vector<8x8xf32>
    %c1_34 = arith.constant 1 : index
    %c0_35 = arith.constant 0 : index
    %c0_36 = arith.constant 0 : index
    %56 = vector.load %arg12[%c1_34, %c0_35, %c0_36] : memref<4x8x1xf32, #tpu.memory_space<vmem>>, vector<1x8x1xf32>
    %57 = vector.shape_cast %56 : vector<1x8x1xf32> to vector<8x1xf32>
    %58 = arith.mulf %52, %57 : vector<8x1xf32>
    %cst_37 = arith.constant dense<0.000000e+00> : vector<8xf32>
    %59 = vector.multi_reduction <add>, %55, %cst_37 [1] : vector<8x8xf32> to vector<8xf32>
    %60 = vector.shape_cast %59 : vector<8xf32> to vector<8x1xf32>
    %61 = arith.addf %58, %60 : vector<8x1xf32>
    %c1_38 = arith.constant 1 : index
    %c0_39 = arith.constant 0 : index
    %c0_40 = arith.constant 0 : index
    %62 = vector.load %arg12[%c1_38, %c0_39, %c0_40] : memref<4x8x1xf32, #tpu.memory_space<vmem>>, vector<1x8x1xf32>
    %63 = vector.shape_cast %62 : vector<1x8x1xf32> to vector<8x1xf32>
    %64 = vector.shape_cast %61 : vector<8x1xf32> to vector<1x8x1xf32>
    tpu.vector_store %arg12[%c1_38, %c0_39, %c0_40], %64 {strides = array<i32>} : memref<4x8x1xf32, #tpu.memory_space<vmem>>, vector<1x8x1xf32>,
    %c1_41 = arith.constant 1 : index
    %c0_42 = arith.constant 0 : index
    %c0_43 = arith.constant 0 : index
    %65 = vector.load %arg13[%c1_41, %c0_42, %c0_43] : memref<4x8x128xf32, #tpu.memory_space<vmem>>, vector<1x8x128xf32>
    %66 = vector.shape_cast %65 : vector<1x8x128xf32> to vector<8x128xf32>
    %67 = vector.broadcast %52 : vector<8x1xf32> to vector<8x128xf32>
    %68 = arith.mulf %67, %66 : vector<8x128xf32>
    %cst_44 = arith.constant dense<0.000000e+00> : vector<8x128xf32>
    %69 = tpu.matmul %55, %44, %cst_44 {dimension_numbers = #tpu.dot_dimension_numbers<[1], [0], [0], [1], [0, 0, 1, 1], [], []>} : vector<8x8xf32>, vector<8x128xf32>, vector<8x128xf32> -> vector<8x128xf32>
    %70 = arith.addf %68, %69 : vector<8x128xf32>
    %c1_45 = arith.constant 1 : index
    %c0_46 = arith.constant 0 : index
    %c0_47 = arith.constant 0 : index
    %71 = vector.load %arg13[%c1_45, %c0_46, %c0_47] : memref<4x8x128xf32, #tpu.memory_space<vmem>>, vector<1x8x128xf32>
    %72 = vector.shape_cast %71 : vector<1x8x128xf32> to vector<8x128xf32>
    %73 = vector.shape_cast %70 : vector<8x128xf32> to vector<1x8x128xf32>
    tpu.vector_store %arg13[%c1_45, %c0_46, %c0_47], %73 {strides = array<i32>} : memref<4x8x128xf32, #tpu.memory_space<vmem>>, vector<1x8x128xf32>,
    %c1_48 = arith.constant 1 : index
    %c0_49 = arith.constant 0 : index
    %c0_50 = arith.constant 0 : index
    %74 = vector.load %arg11[%c1_48, %c0_49, %c0_50] : memref<4x8x1xf32, #tpu.memory_space<vmem>>, vector<1x8x1xf32>
    %75 = vector.shape_cast %74 : vector<1x8x1xf32> to vector<8x1xf32>
    %76 = vector.shape_cast %50 : vector<8x1xf32> to vector<1x8x1xf32>
    tpu.vector_store %arg11[%c1_48, %c0_49, %c0_50], %76 {strides = array<i32>} : memref<4x8x1xf32, #tpu.memory_space<vmem>>, vector<1x8x1xf32>,
    %c0_51 = arith.constant 0 : index
    %c256 = arith.constant 256 : index
    %77 = vector.load %arg10[%c0_51, %c256] : memref<8x512xf32, #tpu.memory_space<vmem>>, vector<8x128xf32>
    %78 = vector.extract_strided_slice %6 {offsets = [0, 256], sizes = [8, 128], strides = [1, 1]} : vector<8x1024xf32> to vector<8x128xf32>
    %79 = vector.extract_strided_slice %6 {offsets = [0, 768], sizes = [8, 128], strides = [1, 1]} : vector<8x1024xf32> to vector<8x128xf32>
    %cst_52 = arith.constant dense<0.000000e+00> : vector<8x8xf32>
    %80 = tpu.matmul %77, %78, %cst_52 {dimension_numbers = #tpu.dot_dimension_numbers<[1], [1], [0], [0], [0, 0, 1, 0], [], []>} : vector<8x128xf32>, vector<8x128xf32>, vector<8x8xf32> -> vector<8x8xf32>
    %c2 = arith.constant 2 : index
    %c0_53 = arith.constant 0 : index
    %c0_54 = arith.constant 0 : index
    %81 = vector.load %arg11[%c2, %c0_53, %c0_54] : memref<4x8x1xf32, #tpu.memory_space<vmem>>, vector<1x8x1xf32>
    %82 = vector.shape_cast %81 : vector<1x8x1xf32> to vector<8x1xf32>
    %cst_55 = arith.constant dense<0xFF800000> : vector<8xf32>
    %83 = vector.multi_reduction <maximumf>, %80, %cst_55 [1] : vector<8x8xf32> to vector<8xf32>
    %84 = vector.shape_cast %83 : vector<8xf32> to vector<8x1xf32>
    %85 = arith.maximumf %82, %84 : vector<8x1xf32>
    %86 = arith.subf %82, %85 : vector<8x1xf32>
    %87 = math.exp %86 : vector<8x1xf32>
    %88 = vector.broadcast %85 : vector<8x1xf32> to vector<8x8xf32>
    %89 = arith.subf %80, %88 : vector<8x8xf32>
    %90 = math.exp %89 : vector<8x8xf32>
    %c2_56 = arith.constant 2 : index
    %c0_57 = arith.constant 0 : index
    %c0_58 = arith.constant 0 : index
    %91 = vector.load %arg12[%c2_56, %c0_57, %c0_58] : memref<4x8x1xf32, #tpu.memory_space<vmem>>, vector<1x8x1xf32>
    %92 = vector.shape_cast %91 : vector<1x8x1xf32> to vector<8x1xf32>
    %93 = arith.mulf %87, %92 : vector<8x1xf32>
    %cst_59 = arith.constant dense<0.000000e+00> : vector<8xf32>
    %94 = vector.multi_reduction <add>, %90, %cst_59 [1] : vector<8x8xf32> to vector<8xf32>
    %95 = vector.shape_cast %94 : vector<8xf32> to vector<8x1xf32>
    %96 = arith.addf %93, %95 : vector<8x1xf32>
    %c2_60 = arith.constant 2 : index
    %c0_61 = arith.constant 0 : index
    %c0_62 = arith.constant 0 : index
    %97 = vector.load %arg12[%c2_60, %c0_61, %c0_62] : memref<4x8x1xf32, #tpu.memory_space<vmem>>, vector<1x8x1xf32>
    %98 = vector.shape_cast %97 : vector<1x8x1xf32> to vector<8x1xf32>
    %99 = vector.shape_cast %96 : vector<8x1xf32> to vector<1x8x1xf32>
    tpu.vector_store %arg12[%c2_60, %c0_61, %c0_62], %99 {strides = array<i32>} : memref<4x8x1xf32, #tpu.memory_space<vmem>>, vector<1x8x1xf32>,
    %c2_63 = arith.constant 2 : index
    %c0_64 = arith.constant 0 : index
    %c0_65 = arith.constant 0 : index
    %100 = vector.load %arg13[%c2_63, %c0_64, %c0_65] : memref<4x8x128xf32, #tpu.memory_space<vmem>>, vector<1x8x128xf32>
    %101 = vector.shape_cast %100 : vector<1x8x128xf32> to vector<8x128xf32>
    %102 = vector.broadcast %87 : vector<8x1xf32> to vector<8x128xf32>
    %103 = arith.mulf %102, %101 : vector<8x128xf32>
    %cst_66 = arith.constant dense<0.000000e+00> : vector<8x128xf32>
    %104 = tpu.matmul %90, %79, %cst_66 {dimension_numbers = #tpu.dot_dimension_numbers<[1], [0], [0], [1], [0, 0, 1, 1], [], []>} : vector<8x8xf32>, vector<8x128xf32>, vector<8x128xf32> -> vector<8x128xf32>
    %105 = arith.addf %103, %104 : vector<8x128xf32>
    %c2_67 = arith.constant 2 : index
    %c0_68 = arith.constant 0 : index
    %c0_69 = arith.constant 0 : index
    %106 = vector.load %arg13[%c2_67, %c0_68, %c0_69] : memref<4x8x128xf32, #tpu.memory_space<vmem>>, vector<1x8x128xf32>
    %107 = vector.shape_cast %106 : vector<1x8x128xf32> to vector<8x128xf32>
    %108 = vector.shape_cast %105 : vector<8x128xf32> to vector<1x8x128xf32>
    tpu.vector_store %arg13[%c2_67, %c0_68, %c0_69], %108 {strides = array<i32>} : memref<4x8x128xf32, #tpu.memory_space<vmem>>, vector<1x8x128xf32>,
    %c2_70 = arith.constant 2 : index
    %c0_71 = arith.constant 0 : index
    %c0_72 = arith.constant 0 : index
    %109 = vector.load %arg11[%c2_70, %c0_71, %c0_72] : memref<4x8x1xf32, #tpu.memory_space<vmem>>, vector<1x8x1xf32>
    %110 = vector.shape_cast %109 : vector<1x8x1xf32> to vector<8x1xf32>
    %111 = vector.shape_cast %85 : vector<8x1xf32> to vector<1x8x1xf32>
    tpu.vector_store %arg11[%c2_70, %c0_71, %c0_72], %111 {strides = array<i32>} : memref<4x8x1xf32, #tpu.memory_space<vmem>>, vector<1x8x1xf32>,
    %c0_73 = arith.constant 0 : index
    %c384 = arith.constant 384 : index
    %112 = vector.load %arg10[%c0_73, %c384] : memref<8x512xf32, #tpu.memory_space<vmem>>, vector<8x128xf32>
    %113 = vector.extract_strided_slice %6 {offsets = [0, 384], sizes = [8, 128], strides = [1, 1]} : vector<8x1024xf32> to vector<8x128xf32>
    %114 = vector.extract_strided_slice %6 {offsets = [0, 896], sizes = [8, 128], strides = [1, 1]} : vector<8x1024xf32> to vector<8x128xf32>
    %cst_74 = arith.constant dense<0.000000e+00> : vector<8x8xf32>
    %115 = tpu.matmul %112, %113, %cst_74 {dimension_numbers = #tpu.dot_dimension_numbers<[1], [1], [0], [0], [0, 0, 1, 0], [], []>} : vector<8x128xf32>, vector<8x128xf32>, vector<8x8xf32> -> vector<8x8xf32>
    %c3 = arith.constant 3 : index
    %c0_75 = arith.constant 0 : index
    %c0_76 = arith.constant 0 : index
    %116 = vector.load %arg11[%c3, %c0_75, %c0_76] : memref<4x8x1xf32, #tpu.memory_space<vmem>>, vector<1x8x1xf32>
    %117 = vector.shape_cast %116 : vector<1x8x1xf32> to vector<8x1xf32>
    %cst_77 = arith.constant dense<0xFF800000> : vector<8xf32>
    %118 = vector.multi_reduction <maximumf>, %115, %cst_77 [1] : vector<8x8xf32> to vector<8xf32>
    %119 = vector.shape_cast %118 : vector<8xf32> to vector<8x1xf32>
    %120 = arith.maximumf %117, %119 : vector<8x1xf32>
    %121 = arith.subf %117, %120 : vector<8x1xf32>
    %122 = math.exp %121 : vector<8x1xf32>
    %123 = vector.broadcast %120 : vector<8x1xf32> to vector<8x8xf32>
    %124 = arith.subf %115, %123 : vector<8x8xf32>
    %125 = math.exp %124 : vector<8x8xf32>
    %c3_78 = arith.constant 3 : index
    %c0_79 = arith.constant 0 : index
    %c0_80 = arith.constant 0 : index
    %126 = vector.load %arg12[%c3_78, %c0_79, %c0_80] : memref<4x8x1xf32, #tpu.memory_space<vmem>>, vector<1x8x1xf32>
    %127 = vector.shape_cast %126 : vector<1x8x1xf32> to vector<8x1xf32>
    %128 = arith.mulf %122, %127 : vector<8x1xf32>
    %cst_81 = arith.constant dense<0.000000e+00> : vector<8xf32>
    %129 = vector.multi_reduction <add>, %125, %cst_81 [1] : vector<8x8xf32> to vector<8xf32>
    %130 = vector.shape_cast %129 : vector<8xf32> to vector<8x1xf32>
    %131 = arith.addf %128, %130 : vector<8x1xf32>
    %c3_82 = arith.constant 3 : index
    %c0_83 = arith.constant 0 : index
    %c0_84 = arith.constant 0 : index
    %132 = vector.load %arg12[%c3_82, %c0_83, %c0_84] : memref<4x8x1xf32, #tpu.memory_space<vmem>>, vector<1x8x1xf32>
    %133 = vector.shape_cast %132 : vector<1x8x1xf32> to vector<8x1xf32>
    %134 = vector.shape_cast %131 : vector<8x1xf32> to vector<1x8x1xf32>
    tpu.vector_store %arg12[%c3_82, %c0_83, %c0_84], %134 {strides = array<i32>} : memref<4x8x1xf32, #tpu.memory_space<vmem>>, vector<1x8x1xf32>,
    %c3_85 = arith.constant 3 : index
    %c0_86 = arith.constant 0 : index
    %c0_87 = arith.constant 0 : index
    %135 = vector.load %arg13[%c3_85, %c0_86, %c0_87] : memref<4x8x128xf32, #tpu.memory_space<vmem>>, vector<1x8x128xf32>
    %136 = vector.shape_cast %135 : vector<1x8x128xf32> to vector<8x128xf32>
    %137 = vector.broadcast %122 : vector<8x1xf32> to vector<8x128xf32>
    %138 = arith.mulf %137, %136 : vector<8x128xf32>
    %cst_88 = arith.constant dense<0.000000e+00> : vector<8x128xf32>
    %139 = tpu.matmul %125, %114, %cst_88 {dimension_numbers = #tpu.dot_dimension_numbers<[1], [0], [0], [1], [0, 0, 1, 1], [], []>} : vector<8x8xf32>, vector<8x128xf32>, vector<8x128xf32> -> vector<8x128xf32>
    %140 = arith.addf %138, %139 : vector<8x128xf32>
    %c3_89 = arith.constant 3 : index
    %c0_90 = arith.constant 0 : index
    %c0_91 = arith.constant 0 : index
    %141 = vector.load %arg13[%c3_89, %c0_90, %c0_91] : memref<4x8x128xf32, #tpu.memory_space<vmem>>, vector<1x8x128xf32>
    %142 = vector.shape_cast %141 : vector<1x8x128xf32> to vector<8x128xf32>
    %143 = vector.shape_cast %140 : vector<8x128xf32> to vector<1x8x128xf32>
    tpu.vector_store %arg13[%c3_89, %c0_90, %c0_91], %143 {strides = array<i32>} : memref<4x8x128xf32, #tpu.memory_space<vmem>>, vector<1x8x128xf32>,
    %c3_92 = arith.constant 3 : index
    %c0_93 = arith.constant 0 : index
    %c0_94 = arith.constant 0 : index
    %144 = vector.load %arg11[%c3_92, %c0_93, %c0_94] : memref<4x8x1xf32, #tpu.memory_space<vmem>>, vector<1x8x1xf32>
    %145 = vector.shape_cast %144 : vector<1x8x1xf32> to vector<8x1xf32>
    %146 = vector.shape_cast %120 : vector<8x1xf32> to vector<1x8x1xf32>
    tpu.vector_store %arg11[%c3_92, %c0_93, %c0_94], %146 {strides = array<i32>} : memref<4x8x1xf32, #tpu.memory_space<vmem>>, vector<1x8x1xf32>,
    %c0_i32_95 = arith.constant 0 : i32
    %147 = arith.cmpi eq, %arg2, %c0_i32_95 : i32
    %148 = arith.extui %147 : i1 to i32
    %c0_i32_96 = arith.constant 0 : i32
    %149 = arith.cmpi ne, %148, %c0_i32_96 : i32
    scf.if %149 {
      %c0_97 = arith.constant 0 : index
      %c0_98 = arith.constant 0 : index
      %150 = vector.load %arg8[%c0_97, %c0_98] : memref<1x128xf32, #tpu.memory_space<vmem>>, vector<1x128xf32>
      %c0_99 = arith.constant 0 : index
      %c0_100 = arith.constant 0 : index
      %c0_101 = arith.constant 0 : index
      %151 = vector.load %arg13[%c0_99, %c0_100, %c0_101] : memref<4x8x128xf32, #tpu.memory_space<vmem>>, vector<1x8x128xf32>
      %152 = vector.shape_cast %151 : vector<1x8x128xf32> to vector<8x128xf32>
      %c0_102 = arith.constant 0 : index
      %c0_103 = arith.constant 0 : index
      %c0_104 = arith.constant 0 : index
      %153 = vector.load %arg12[%c0_102, %c0_103, %c0_104] : memref<4x8x1xf32, #tpu.memory_space<vmem>>, vector<1x8x1xf32>
      %154 = vector.shape_cast %153 : vector<1x8x1xf32> to vector<8x1xf32>
      %155 = vector.broadcast %154 : vector<8x1xf32> to vector<8x128xf32>
      %156 = arith.divf %152, %155 : vector<8x128xf32>
      %c0_105 = arith.constant 0 : index
      %c0_106 = arith.constant 0 : index
      %157 = vector.load %arg7[%c0_105, %c0_106] : memref<512x128xf32, #tpu.memory_space<vmem>>, vector<128x128xf32>
      %cst_107 = arith.constant dense<0.000000e+00> : vector<8x128xf32>
      %158 = tpu.matmul %156, %157, %cst_107 {dimension_numbers = #tpu.dot_dimension_numbers<[1], [0], [0], [1], [0, 0, 1, 1], [], []>} : vector<8x128xf32>, vector<128x128xf32>, vector<8x128xf32> -> vector<8x128xf32>
      %159 = vector.broadcast %150 : vector<1x128xf32> to vector<8x128xf32>
      %160 = arith.addf %159, %158 : vector<8x128xf32>
      %c1_108 = arith.constant 1 : index
      %c0_109 = arith.constant 0 : index
      %c0_110 = arith.constant 0 : index
      %161 = vector.load %arg13[%c1_108, %c0_109, %c0_110] : memref<4x8x128xf32, #tpu.memory_space<vmem>>, vector<1x8x128xf32>
      %162 = vector.shape_cast %161 : vector<1x8x128xf32> to vector<8x128xf32>
      %c1_111 = arith.constant 1 : index
      %c0_112 = arith.constant 0 : index
      %c0_113 = arith.constant 0 : index
      %163 = vector.load %arg12[%c1_111, %c0_112, %c0_113] : memref<4x8x1xf32, #tpu.memory_space<vmem>>, vector<1x8x1xf32>
      %164 = vector.shape_cast %163 : vector<1x8x1xf32> to vector<8x1xf32>
      %165 = vector.broadcast %164 : vector<8x1xf32> to vector<8x128xf32>
      %166 = arith.divf %162, %165 : vector<8x128xf32>
      %c128_114 = arith.constant 128 : index
      %c0_115 = arith.constant 0 : index
      %167 = vector.load %arg7[%c128_114, %c0_115] : memref<512x128xf32, #tpu.memory_space<vmem>>, vector<128x128xf32>
      %cst_116 = arith.constant dense<0.000000e+00> : vector<8x128xf32>
      %168 = tpu.matmul %166, %167, %cst_116 {dimension_numbers = #tpu.dot_dimension_numbers<[1], [0], [0], [1], [0, 0, 1, 1], [], []>} : vector<8x128xf32>, vector<128x128xf32>, vector<8x128xf32> -> vector<8x128xf32>
      %169 = arith.addf %160, %168 : vector<8x128xf32>
      %c2_117 = arith.constant 2 : index
      %c0_118 = arith.constant 0 : index
      %c0_119 = arith.constant 0 : index
      %170 = vector.load %arg13[%c2_117, %c0_118, %c0_119] : memref<4x8x128xf32, #tpu.memory_space<vmem>>, vector<1x8x128xf32>
      %171 = vector.shape_cast %170 : vector<1x8x128xf32> to vector<8x128xf32>
      %c2_120 = arith.constant 2 : index
      %c0_121 = arith.constant 0 : index
      %c0_122 = arith.constant 0 : index
      %172 = vector.load %arg12[%c2_120, %c0_121, %c0_122] : memref<4x8x1xf32, #tpu.memory_space<vmem>>, vector<1x8x1xf32>
      %173 = vector.shape_cast %172 : vector<1x8x1xf32> to vector<8x1xf32>
      %174 = vector.broadcast %173 : vector<8x1xf32> to vector<8x128xf32>
      %175 = arith.divf %171, %174 : vector<8x128xf32>
      %c256_123 = arith.constant 256 : index
      %c0_124 = arith.constant 0 : index
      %176 = vector.load %arg7[%c256_123, %c0_124] : memref<512x128xf32, #tpu.memory_space<vmem>>, vector<128x128xf32>
      %cst_125 = arith.constant dense<0.000000e+00> : vector<8x128xf32>
      %177 = tpu.matmul %175, %176, %cst_125 {dimension_numbers = #tpu.dot_dimension_numbers<[1], [0], [0], [1], [0, 0, 1, 1], [], []>} : vector<8x128xf32>, vector<128x128xf32>, vector<8x128xf32> -> vector<8x128xf32>
      %178 = arith.addf %169, %177 : vector<8x128xf32>
      %c3_126 = arith.constant 3 : index
      %c0_127 = arith.constant 0 : index
      %c0_128 = arith.constant 0 : index
      %179 = vector.load %arg13[%c3_126, %c0_127, %c0_128] : memref<4x8x128xf32, #tpu.memory_space<vmem>>, vector<1x8x128xf32>
      %180 = vector.shape_cast %179 : vector<1x8x128xf32> to vector<8x128xf32>
      %c3_129 = arith.constant 3 : index
      %c0_130 = arith.constant 0 : index
      %c0_131 = arith.constant 0 : index
      %181 = vector.load %arg12[%c3_129, %c0_130, %c0_131] : memref<4x8x1xf32, #tpu.memory_space<vmem>>, vector<1x8x1xf32>
      %182 = vector.shape_cast %181 : vector<1x8x1xf32> to vector<8x1xf32>
      %183 = vector.broadcast %182 : vector<8x1xf32> to vector<8x128xf32>
      %184 = arith.divf %180, %183 : vector<8x128xf32>
      %c384_132 = arith.constant 384 : index
      %c0_133 = arith.constant 0 : index
      %185 = vector.load %arg7[%c384_132, %c0_133] : memref<512x128xf32, #tpu.memory_space<vmem>>, vector<128x128xf32>
      %cst_134 = arith.constant dense<0.000000e+00> : vector<8x128xf32>
      %186 = tpu.matmul %184, %185, %cst_134 {dimension_numbers = #tpu.dot_dimension_numbers<[1], [0], [0], [1], [0, 0, 1, 1], [], []>} : vector<8x128xf32>, vector<128x128xf32>, vector<8x128xf32> -> vector<8x128xf32>
      %187 = arith.addf %178, %186 : vector<8x128xf32>
      %c0_135 = arith.constant 0 : index
      %c0_136 = arith.constant 0 : index
      %c0_137 = arith.constant 0 : index
      %188 = vector.load %arg9[%c0_135, %c0_136, %c0_137] : memref<1x8x128xf32, #tpu.memory_space<vmem>>, vector<1x8x128xf32>
      %189 = vector.shape_cast %188 : vector<1x8x128xf32> to vector<8x128xf32>
      %190 = vector.shape_cast %187 : vector<8x128xf32> to vector<1x8x128xf32>
      tpu.vector_store %arg9[%c0_135, %c0_136, %c0_137], %190 {strides = array<i32>} : memref<1x8x128xf32, #tpu.memory_space<vmem>>, vector<1x8x128xf32>,
    } else {
    }
    return
  }
  func.func @transform_0(%arg0: i32, %arg1: i32, %arg2: i32) -> (i32, i32, i32) {
    %c0_i32 = arith.constant 0 : i32
    %c0_i32_0 = arith.constant 0 : i32
    return %arg0, %arg1, %c0_i32 : i32, i32, i32
  }
  func.func @transform_1(%arg0: i32, %arg1: i32, %arg2: i32) -> (i32, i32, i32) {
    %c0_i32 = arith.constant 0 : i32
    %c0_i32_0 = arith.constant 0 : i32
    return %arg0, %arg2, %c0_i32 : i32, i32, i32
  }
  func.func @transform_2(%arg0: i32, %arg1: i32, %arg2: i32) -> (i32, i32) {
    %c0_i32 = arith.constant 0 : i32
    %c0_i32_0 = arith.constant 0 : i32
    %c0_i32_1 = arith.constant 0 : i32
    return %c0_i32, %c0_i32_0 : i32, i32
  }
  func.func @transform_3(%arg0: i32, %arg1: i32, %arg2: i32) -> (i32, i32) {
    %c0_i32 = arith.constant 0 : i32
    %c0_i32_0 = arith.constant 0 : i32
    %c0_i32_1 = arith.constant 0 : i32
    return %c0_i32, %c0_i32_0 : i32, i32
  }
  func.func @transform_4(%arg0: i32, %arg1: i32, %arg2: i32) -> (i32, i32) {
    %c0_i32 = arith.constant 0 : i32
    %c0_i32_0 = arith.constant 0 : i32
    %c0_i32_1 = arith.constant 0 : i32
    return %c0_i32, %c0_i32_0 : i32, i32
  }
  func.func @transform_5(%arg0: i32, %arg1: i32, %arg2: i32) -> (i32, i32) {
    %c0_i32 = arith.constant 0 : i32
    %c0_i32_0 = arith.constant 0 : i32
    %c0_i32_1 = arith.constant 0 : i32
    return %c0_i32, %c0_i32_0 : i32, i32
  }
  func.func @transform_6(%arg0: i32, %arg1: i32, %arg2: i32) -> (i32, i32, i32) {
    %c0_i32 = arith.constant 0 : i32
    %c0_i32_0 = arith.constant 0 : i32
    return %arg0, %arg1, %c0_i32 : i32, i32, i32
  }
}

</mosaic_0001>

<llo_original>
// kernel: multi_head_attention.1
$region0: #{multi_head_attention.1}
  #allocation0 [shape = 'u32[]', space=smem, size = 0x4, offset = 0x4, fixed_abs, tag = 'smem constant byte address 0x4 - core index']
  #allocation1 [shape = 'u32[72,128]{1,0:T(1,128)}', space=vmem, size = 0x9000, scoped, tag = 'internal scratch']
  #allocation2 [shape = 'f32[8,512]{1,0:T(8,128)}', space=vmem, size = 0x4000, scoped, tag = 'scratch operand']
  #allocation3 [shape = 'f32[4,8,1]{2,1,0:T(8,128)}', space=vmem, size = 0x4000, scoped, tag = 'scratch operand']
  #allocation4 [shape = 'f32[4,8,1]{2,1,0:T(8,128)}', space=vmem, size = 0x4000, scoped, tag = 'scratch operand']
  #allocation5 [shape = 'f32[4,8,128]{2,1,0:T(8,128)}', space=vmem, size = 0x4000, scoped, tag = 'scratch operand']
  %s0 = inlined_call_operand.vmem [shape: f32[2,8,128], index: 0, kind: input, shape index: {}, may-alias: {0,1}]
  %s1 = inlined_call_operand.vmem [shape: f32[2,8,128], index: 1, kind: input, shape index: {}, may-alias: {0,1}]
  %s2 = inlined_call_operand.vmem [shape: f32[128,512], index: 2, kind: input, shape index: {}]
  %s3 = inlined_call_operand.vmem [shape: f32[128,1024], index: 3, kind: input, shape index: {}]
  %s4 = inlined_call_operand.vmem [shape: f32[512,128], index: 4, kind: input, shape index: {}]
  %s5 = inlined_call_operand.vmem [shape: f32[1,128], index: 5, kind: input, shape index: {}]
  %s6 = inlined_call_operand.hbm [shape: f32[2,8,128], index: 6, kind: output, shape index: {}]
  %s7 = sld [smem:[#allocation0]]
  $region65: #{multi_head_attention.1} parent=0
    _
  %s9 = ssub.s32 1, %s7
  %s10 = scalar_select 0, %s9, %s7
  $region1: #{multi_head_attention.1} parent=0
    #allocation6 [shape = 'u8[8192]{0}', space=vmem, size = 0x2000, scoped, tag = 'output window, operand 0']
    #allocation7 [shape = 's32[2]{0}', space=sflag, size = 0x8, scoped, tag = 'scoped memory for multi_head_attention.1']
    %11 = vsyncpa [#allocation7], 0
    %s12 = scalar_lea.sflag [#allocation7], 1
    %13 = vsyncpa %s12, 0
    loop: start=0, step=1, limit=4
    $region2: #{multi_head_attention.1} parent=1 // loop_pre_header
      _
    $region3: #{multi_head_attention.1} parent=1 // loop_header
      %s15 = sphi 0, %s19
      %p16 = scmp.ge.s32.totalorder %s15, 4
      %s22 = sphi 0, %s41
      %s23 = sphi 0, %s37
      %s24 = sphi 0, %s33
      %s25 = sphi 0, %s22
      %s26 = sphi 0, %s23
      %s27 = sphi 0, %s24
      %s28 = sphi 0, %s25
      %s29 = sphi 0, %s26
      %s30 = sphi 0, %s27
      %s46 = sphi 0, %s48
      %s49 = sphi 0, %s46
      %s50 = sphi 0, %s49
      %s66 = sphi 0, %s50
      %s74 = sphi 0, %s76
      %s77 = sphi 0, %s74
      %s78 = sphi 0, %s77
      %s94 = sphi 0, %s78
      %s98 = sphi 0, %s98
      %s100 = sphi 0, %s98
      %s101 = sphi 0, %s100
      %s115 = sphi 0, %s101
      %s119 = sphi 0, %s119
      %s121 = sphi 0, %s119
      %s122 = sphi 0, %s121
      %s136 = sphi 0, %s122
      %s140 = sphi 0, %s140
      %s142 = sphi 0, %s140
      %s143 = sphi 0, %s142
      %s157 = sphi 0, %s143
      %s161 = sphi 0, %s161
      %s163 = sphi 0, %s161
      %s164 = sphi 0, %s163
      %s178 = sphi 0, %s164
      %s186 = sphi 0, %s188
      %s189 = sphi 0, %s186
      %s190 = sphi 0, %s189
      %s206 = sphi 0, %s190
    $region4: #{multi_head_attention.1} parent=1 // loop_header_branch
      %18 = sbr.rel (%p16) target = $region8
    $region5: #{multi_head_attention.1} parent=1 // loop_body
      %s20 = ssub.s32 %s15, 1
      %s21 = ssub.s32 %s15, 2
      %s31 = sadd.s32 1, %s24
      %p32 = scmp.ge.s32.totalorder %s31, 1
      %s33 = scalar_select %p32, 0, %s31
      %s34 = sadd.s32 1, %s23
      %s35 = scalar_select %p32, %s34, %s23
      %p36 = scmp.ge.s32.totalorder %s35, 1
      %s37 = scalar_select %p36, 0, %s35
      %s38 = sadd.s32 1, %s22
      %s39 = scalar_select %p36, %s38, %s22
      %p40 = scmp.ge.s32.totalorder %s39, 2
      %s41 = scalar_select %p40, 0, %s39
      %s42 = ssub.s32 %s22, %s41
      %s43 = ssub.s32 %s23, %s37
      %s44 = sor.u32 %s42, %s43
      %p45 = scmp.eq.s32.totalorder %s44, 0
      %s47 = sadd.s32 %s46, 1
      %s48 = scalar_select %p45, %s46, %s47
      %p51 = pneg %p45
      %p52 = scmp.eq.s32.totalorder %s15, 1
      %p53 = por %p51, %p52
      %p54 = scmp.ne.s32.totalorder %s46, %s49
      %p55 = scmp.eq.s32.totalorder %s15, 0
      %p56 = por %p54, %p55
      %p57 = scmp.ne.s32.totalorder %s46, %s49
      %p58 = scmp.eq.s32.totalorder %s20, 1
      %p59 = por %p57, %p58
      %p60 = scmp.ne.s32.totalorder %s49, %s50
      %p61 = scmp.eq.s32.totalorder %s20, 0
      %p62 = por %p60, %p61
      %p63 = scmp.ne.s32.totalorder %s49, %s50
      %p64 = scmp.eq.s32.totalorder %s21, 1
      %p65 = por %p63, %p64
      %p67 = scmp.ne.s32.totalorder %s50, %s66
      %p68 = scmp.eq.s32.totalorder %s21, 0
      %p69 = por %p67, %p68
      %s70 = ssub.s32 %s22, %s41
      %s71 = ssub.s32 %s24, %s33
      %s72 = sor.u32 %s70, %s71
      %p73 = scmp.eq.s32.totalorder %s72, 0
      %s75 = sadd.s32 %s74, 1
      %s76 = scalar_select %p73, %s74, %s75
      %p79 = pneg %p73
      %p80 = scmp.eq.s32.totalorder %s15, 1
      %p81 = por %p79, %p80
      %p82 = scmp.ne.s32.totalorder %s74, %s77
      %p83 = scmp.eq.s32.totalorder %s15, 0
      %p84 = por %p82, %p83
      %p85 = scmp.ne.s32.totalorder %s74, %s77
      %p86 = scmp.eq.s32.totalorder %s20, 1
      %p87 = por %p85, %p86
      %p88 = scmp.ne.s32.totalorder %s77, %s78
      %p89 = scmp.eq.s32.totalorder %s20, 0
      %p90 = por %p88, %p89
      %p91 = scmp.ne.s32.totalorder %s77, %s78
      %p92 = scmp.eq.s32.totalorder %s21, 1
      %p93 = por %p91, %p92
      %p95 = scmp.ne.s32.totalorder %s78, %s94
      %p96 = scmp.eq.s32.totalorder %s21, 0
      %p97 = por %p95, %p96
      %s99 = sadd.s32 %s98, 1
      %p102 = scmp.eq.s32.totalorder %s15, 1
      %p103 = scmp.ne.s32.totalorder %s98, %s100
      %p104 = scmp.eq.s32.totalorder %s15, 0
      %p105 = por %p103, %p104
      %p106 = scmp.ne.s32.totalorder %s98, %s100
      %p107 = scmp.eq.s32.totalorder %s20, 1
      %p108 = por %p106, %p107
      %p109 = scmp.ne.s32.totalorder %s100, %s101
      %p110 = scmp.eq.s32.totalorder %s20, 0
      %p111 = por %p109, %p110
      %p112 = scmp.ne.s32.totalorder %s100, %s101
      %p113 = scmp.eq.s32.totalorder %s21, 1
      %p114 = por %p112, %p113
      %p116 = scmp.ne.s32.totalorder %s101, %s115
      %p117 = scmp.eq.s32.totalorder %s21, 0
      %p118 = por %p116, %p117
      %s120 = sadd.s32 %s119, 1
      %p123 = scmp.eq.s32.totalorder %s15, 1
      %p124 = scmp.ne.s32.totalorder %s119, %s121
      %p125 = scmp.eq.s32.totalorder %s15, 0
      %p126 = por %p124, %p125
      %p127 = scmp.ne.s32.totalorder %s119, %s121
      %p128 = scmp.eq.s32.totalorder %s20, 1
      %p129 = por %p127, %p128
      %p130 = scmp.ne.s32.totalorder %s121, %s122
      %p131 = scmp.eq.s32.totalorder %s20, 0
      %p132 = por %p130, %p131
      %p133 = scmp.ne.s32.totalorder %s121, %s122
      %p134 = scmp.eq.s32.totalorder %s21, 1
      %p135 = por %p133, %p134
      %p137 = scmp.ne.s32.totalorder %s122, %s136
      %p138 = scmp.eq.s32.totalorder %s21, 0
      %p139 = por %p137, %p138
      %s141 = sadd.s32 %s140, 1
      %p144 = scmp.eq.s32.totalorder %s15, 1
      %p145 = scmp.ne.s32.totalorder %s140, %s142
      %p146 = scmp.eq.s32.totalorder %s15, 0
      %p147 = por %p145, %p146
      %p148 = scmp.ne.s32.totalorder %s140, %s142
      %p149 = scmp.eq.s32.totalorder %s20, 1
      %p150 = por %p148, %p149
      %p151 = scmp.ne.s32.totalorder %s142, %s143
      %p152 = scmp.eq.s32.totalorder %s20, 0
      %p153 = por %p151, %p152
      %p154 = scmp.ne.s32.totalorder %s142, %s143
      %p155 = scmp.eq.s32.totalorder %s21, 1
      %p156 = por %p154, %p155
      %p158 = scmp.ne.s32.totalorder %s143, %s157
      %p159 = scmp.eq.s32.totalorder %s21, 0
      %p160 = por %p158, %p159
      %s162 = sadd.s32 %s161, 1
      %p165 = scmp.eq.s32.totalorder %s15, 1
      %p166 = scmp.ne.s32.totalorder %s161, %s163
      %p167 = scmp.eq.s32.totalorder %s15, 0
      %p168 = por %p166, %p167
      %p169 = scmp.ne.s32.totalorder %s161, %s163
      %p170 = scmp.eq.s32.totalorder %s20, 1
      %p171 = por %p169, %p170
      %p172 = scmp.ne.s32.totalorder %s163, %s164
      %p173 = scmp.eq.s32.totalorder %s20, 0
      %p174 = por %p172, %p173
      %p175 = scmp.ne.s32.totalorder %s163, %s164
      %p176 = scmp.eq.s32.totalorder %s21, 1
      %p177 = por %p175, %p176
      %p179 = scmp.ne.s32.totalorder %s164, %s178
      %p180 = scmp.eq.s32.totalorder %s21, 0
      %p181 = por %p179, %p180
      %s182 = ssub.s32 %s22, %s41
      %s183 = ssub.s32 %s23, %s37
      %s184 = sor.u32 %s182, %s183
      %p185 = scmp.eq.s32.totalorder %s184, 0
      %s187 = sadd.s32 %s186, 1
      %s188 = scalar_select %p185, %s186, %s187
      %p191 = pneg %p185
      %p192 = scmp.eq.s32.totalorder %s15, 1
      %p193 = por %p191, %p192
      %p194 = scmp.ne.s32.totalorder %s186, %s189
      %p195 = scmp.eq.s32.totalorder %s15, 0
      %p196 = por %p194, %p195
      %p197 = scmp.ne.s32.totalorder %s186, %s189
      %p198 = scmp.eq.s32.totalorder %s20, 1
      %p199 = por %p197, %p198
      %p200 = scmp.ne.s32.totalorder %s189, %s190
      %p201 = scmp.eq.s32.totalorder %s20, 0
      %p202 = por %p200, %p201
      %p203 = scmp.ne.s32.totalorder %s189, %s190
      %p204 = scmp.eq.s32.totalorder %s21, 1
      %p205 = por %p203, %p204
      %p207 = scmp.ne.s32.totalorder %s190, %s206
      %p208 = scmp.eq.s32.totalorder %s21, 0
      %p209 = por %p207, %p208
      %p210 = scmp.le.s32.totalorder 1, %s15
      %p211 = scmp.lt.s32.totalorder %s15, 3
      %p212 = pnand %p210, %p211
      %p213 = pneg %p212
      // Predicated region
      $region9: #{multi_head_attention.1} parent=5 // pred_check
        _
      $region10: #{multi_head_attention.1} parent=5 // pred_check_branch
        %215 = sbr.rel (%p212) target = $region12
      $region11: #{multi_head_attention.1} parent=5 // pred_region
        %s216 = ssub.s32 %s15, 1
        // Predicated region
        $region13: #{multi_head_attention.1} parent=11 // pred_check
          %p217 = pneg %p111
        $region14: #{multi_head_attention.1} parent=11 // pred_check_branch
          %219 = sbr.rel (%p217) target = $region16
        $region15: #{multi_head_attention.1} parent=11 // pred_region
          _
        $region16: #{multi_head_attention.1} parent=11 // pred_fallthru
          _
        // Predicated region
        $region17: #{multi_head_attention.1} parent=11 // pred_check
          %p220 = pneg %p132
        $region18: #{multi_head_attention.1} parent=11 // pred_check_branch
          %222 = sbr.rel (%p220) target = $region20
        $region19: #{multi_head_attention.1} parent=11 // pred_region
          _
        $region20: #{multi_head_attention.1} parent=11 // pred_fallthru
          _
        // Predicated region
        $region21: #{multi_head_attention.1} parent=11 // pred_check
          %p223 = pneg %p153
        $region22: #{multi_head_attention.1} parent=11 // pred_check_branch
          %225 = sbr.rel (%p223) target = $region24
        $region23: #{multi_head_attention.1} parent=11 // pred_region
          _
        $region24: #{multi_head_attention.1} parent=11 // pred_fallthru
          _
        // Predicated region
        $region25: #{multi_head_attention.1} parent=11 // pred_check
          %p226 = pneg %p174
        $region26: #{multi_head_attention.1} parent=11 // pred_check_branch
          %228 = sbr.rel (%p226) target = $region28
        $region27: #{multi_head_attention.1} parent=11 // pred_region
          _
        $region28: #{multi_head_attention.1} parent=11 // pred_fallthru
          _
      $region12: #{multi_head_attention.1} parent=5 // pred_fallthru
        _
      %p229 = scmp.lt.s32.totalorder %s15, 2
      // Predicated region
      $region29: #{multi_head_attention.1} parent=5 // pred_check
        %p230 = pneg %p229
      $region30: #{multi_head_attention.1} parent=5 // pred_check_branch
        %232 = sbr.rel (%p230) target = $region32
      $region31: #{multi_head_attention.1} parent=5 // pred_region
        // Predicated region
        $region33: #{multi_head_attention.1} parent=31 // pred_check
          %p233 = pneg %p56
        $region34: #{multi_head_attention.1} parent=31 // pred_check_branch
          %235 = sbr.rel (%p233) target = $region36
        $region35: #{multi_head_attention.1} parent=31 // pred_region
          %p236 = scmp.lt.s32.totalorder %s22, 1
          %s237 = scalar_select %p236, %s22, 1
          %p238 = scmp.lt.s32.totalorder %s23, 0
          %s239 = scalar_select %p238, %s23, 0
          %s240 = sadd.s32 %s239, %s237
          %s241 = smul.addr %s240, 8
          %s242 = scalar_lea.vmem %s0, %s241
        $region36: #{multi_head_attention.1} parent=31 // pred_fallthru
          _
        // Predicated region
        $region37: #{multi_head_attention.1} parent=31 // pred_check
          %p243 = pneg %p84
        $region38: #{multi_head_attention.1} parent=31 // pred_check_branch
          %245 = sbr.rel (%p243) target = $region40
        $region39: #{multi_head_attention.1} parent=31 // pred_region
          %p246 = scmp.lt.s32.totalorder %s22, 1
          %s247 = scalar_select %p246, %s22, 1
          %p248 = scmp.lt.s32.totalorder %s24, 0
          %s249 = scalar_select %p248, %s24, 0
          %s250 = sadd.s32 %s249, %s247
          %s251 = smul.addr %s250, 8
          %s252 = scalar_lea.vmem %s1, %s251
        $region40: #{multi_head_attention.1} parent=31 // pred_fallthru
          _
      $region32: #{multi_head_attention.1} parent=5 // pred_fallthru
        _
      %p253 = scmp.le.s32.totalorder 1, %s15
      %p254 = scmp.lt.s32.totalorder %s15, 3
      %p255 = pnand %p253, %p254
      %p256 = pneg %p255
      // Predicated region
      $region41: #{multi_head_attention.1} parent=5 // pred_check
        _
      $region42: #{multi_head_attention.1} parent=5 // pred_check_branch
        %258 = sbr.rel (%p255) target = $region44
      $region43: #{multi_head_attention.1} parent=5 // pred_region
        %s259 = ssub.s32 %s15, 1
        %p260 = scmp.lt.s32.totalorder %s25, 1
        %s261 = scalar_select %p260, %s25, 1
        %p262 = scmp.lt.s32.totalorder %s26, 0
        %s263 = scalar_select %p262, %s26, 0
        %s264 = sadd.s32 %s263, %s261
        %s265 = smul.addr %s264, 8
        %s266 = scalar_lea.vmem %s0, %s265
        %p267 = pneg %p62
        %p268 = pneg %p59
        %p269 = scmp.lt.s32.totalorder %s25, 1
        %s270 = scalar_select %p269, %s25, 1
        %p271 = scmp.lt.s32.totalorder %s27, 0
        %s272 = scalar_select %p271, %s27, 0
        %s273 = sadd.s32 %s272, %s270
        %s274 = smul.addr %s273, 8
        %s275 = scalar_lea.vmem %s1, %s274
        %p276 = pneg %p90
        %p277 = pneg %p87
        %p278 = pneg %p111
        %p279 = pneg %p108
        %p280 = pneg %p132
        %p281 = pneg %p129
        %p282 = pneg %p153
        %p283 = pneg %p150
        %p284 = pneg %p174
        %p285 = pneg %p171
        %p286 = pneg %p202
        %p287 = pneg %p199
        %s288 = sand.u32 %s189, 1
        %s289 = scalar_lea.sflag [#allocation7], %s288
        %s290 = sand.u32 %s189, 1
        %s291 = smul.addr %s290, 8
        %s292 = scalar_lea.vmem [#allocation6], %s291
        %p293 = scmp.lt.s32.totalorder %s25, 1
        %s294 = scalar_select %p293, %s25, 1
        %p295 = scmp.lt.s32.totalorder %s26, 0
        %s296 = scalar_select %p295, %s26, 0
        %s297 = sadd.s32 %s296, %s294
        %s298 = smul.addr %s297, 8
        %s299 = scalar_lea.vmem %s0, %s298
        %p300 = scmp.lt.s32.totalorder %s25, 1
        %s301 = scalar_select %p300, %s25, 1
        %p302 = scmp.lt.s32.totalorder %s27, 0
        %s303 = scalar_select %p302, %s27, 0
        %s304 = sadd.s32 %s303, %s301
        %s305 = smul.addr %s304, 8
        %s306 = scalar_lea.vmem %s1, %s305
        %p307 = scmp.eq.s32.totalorder %s27, 0
        // Predicated region
        $region45: #{multi_head_attention.1} parent=43 // pred_check
          %p308 = pneg %p307
        $region46: #{multi_head_attention.1} parent=43 // pred_check_branch
          %310 = sbr.rel (%p308) target = $region48
        $region47: #{multi_head_attention.1} parent=43 // pred_region
          %v311 = vld [vmem:[%s299] sm:$0xff]
          %v312 = vld [vmem:[%s2] sm:$0xff]
          %v313 = vld [vmem:[%s2 + $0x8] sm:$0xff]
          %v314 = vld [vmem:[%s2 + $0x10] sm:$0xff]
          %v315 = vld [vmem:[%s2 + $0x18] sm:$0xff]
          %v316 = vld [vmem:[%s2 + $0x20] sm:$0xff]
          %v317 = vld [vmem:[%s2 + $0x28] sm:$0xff]
          %v318 = vld [vmem:[%s2 + $0x30] sm:$0xff]
          %v319 = vld [vmem:[%s2 + $0x38] sm:$0xff]
          %v320 = vld [vmem:[%s2 + $0x40] sm:$0xff]
          %v321 = vld [vmem:[%s2 + $0x48] sm:$0xff]
          %v322 = vld [vmem:[%s2 + $0x50] sm:$0xff]
          %v323 = vld [vmem:[%s2 + $0x58] sm:$0xff]
          %v324 = vld [vmem:[%s2 + $0x60] sm:$0xff]
          %v325 = vld [vmem:[%s2 + $0x68] sm:$0xff]
          %v326 = vld [vmem:[%s2 + $0x70] sm:$0xff]
          %v327 = vld [vmem:[%s2 + $0x78] sm:$0xff]
          %v328 = vld [vmem:[%s2 + $0x80] sm:$0xff]
          %v329 = vld [vmem:[%s2 + $0x88] sm:$0xff]
          %v330 = vld [vmem:[%s2 + $0x90] sm:$0xff]
          %v331 = vld [vmem:[%s2 + $0x98] sm:$0xff]
          %v332 = vld [vmem:[%s2 + $0xa0] sm:$0xff]
          %v333 = vld [vmem:[%s2 + $0xa8] sm:$0xff]
          %v334 = vld [vmem:[%s2 + $0xb0] sm:$0xff]
          %v335 = vld [vmem:[%s2 + $0xb8] sm:$0xff]
          %v336 = vld [vmem:[%s2 + $0xc0] sm:$0xff]
          %v337 = vld [vmem:[%s2 + $0xc8] sm:$0xff]
          %v338 = vld [vmem:[%s2 + $0xd0] sm:$0xff]
          %v339 = vld [vmem:[%s2 + $0xd8] sm:$0xff]
          %v340 = vld [vmem:[%s2 + $0xe0] sm:$0xff]
          %v341 = vld [vmem:[%s2 + $0xe8] sm:$0xff]
          %v342 = vld [vmem:[%s2 + $0xf0] sm:$0xff]
          %v343 = vld [vmem:[%s2 + $0xf8] sm:$0xff]
          %v344 = vld [vmem:[%s2 + $0x100] sm:$0xff]
          %v345 = vld [vmem:[%s2 + $0x108] sm:$0xff]
          %v346 = vld [vmem:[%s2 + $0x110] sm:$0xff]
          %v347 = vld [vmem:[%s2 + $0x118] sm:$0xff]
          %v348 = vld [vmem:[%s2 + $0x120] sm:$0xff]
          %v349 = vld [vmem:[%s2 + $0x128] sm:$0xff]
          %v350 = vld [vmem:[%s2 + $0x130] sm:$0xff]
          %v351 = vld [vmem:[%s2 + $0x138] sm:$0xff]
          %v352 = vld [vmem:[%s2 + $0x140] sm:$0xff]
          %v353 = vld [vmem:[%s2 + $0x148] sm:$0xff]
          %v354 = vld [vmem:[%s2 + $0x150] sm:$0xff]
          %v355 = vld [vmem:[%s2 + $0x158] sm:$0xff]
          %v356 = vld [vmem:[%s2 + $0x160] sm:$0xff]
          %v357 = vld [vmem:[%s2 + $0x168] sm:$0xff]
          %v358 = vld [vmem:[%s2 + $0x170] sm:$0xff]
          %v359 = vld [vmem:[%s2 + $0x178] sm:$0xff]
          %v360 = vld [vmem:[%s2 + $0x180] sm:$0xff]
          %v361 = vld [vmem:[%s2 + $0x188] sm:$0xff]
          %v362 = vld [vmem:[%s2 + $0x190] sm:$0xff]
          %v363 = vld [vmem:[%s2 + $0x198] sm:$0xff]
          %v364 = vld [vmem:[%s2 + $0x1a0] sm:$0xff]
          %v365 = vld [vmem:[%s2 + $0x1a8] sm:$0xff]
          %v366 = vld [vmem:[%s2 + $0x1b0] sm:$0xff]
          %v367 = vld [vmem:[%s2 + $0x1b8] sm:$0xff]
          %v368 = vld [vmem:[%s2 + $0x1c0] sm:$0xff]
          %v369 = vld [vmem:[%s2 + $0x1c8] sm:$0xff]
          %v370 = vld [vmem:[%s2 + $0x1d0] sm:$0xff]
          %v371 = vld [vmem:[%s2 + $0x1d8] sm:$0xff]
          %v372 = vld [vmem:[%s2 + $0x1e0] sm:$0xff]
          %v373 = vld [vmem:[%s2 + $0x1e8] sm:$0xff]
          %v374 = vld [vmem:[%s2 + $0x1f0] sm:$0xff]
          %v375 = vld [vmem:[%s2 + $0x1f8] sm:$0xff]
          %376 = vmatpush.msra.mxu0 %v372
          %377 = vmatpush.msra.mxu0 %v368
          %378 = vmatpush.msra.mxu0 %v364
          %379 = vmatpush.msra.mxu0 %v360
          %380 = vmatpush.msra.mxu0 %v356
          %381 = vmatpush.msra.mxu0 %v352
          %382 = vmatpush.msra.mxu0 %v348
          %383 = vmatpush.msra.mxu0 %v344
          %384 = vmatpush.msra.mxu0 %v340
          %385 = vmatpush.msra.mxu0 %v336
          %386 = vmatpush.msra.mxu0 %v332
          %387 = vmatpush.msra.mxu0 %v328
          %388 = vmatpush.msra.mxu0 %v324
          %389 = vmatpush.msra.mxu0 %v320
          %390 = vmatpush.msra.mxu0 %v316
          %391 = vmatpush.msra.mxu0 %v312
          %392 = vmatmul.f32.gmra.mxu0 %v311
          %v393 = vpop.f32.mrf.mxu0
          %v394 = vadd.f32 0.0, %v393
          %395 = vdwg.mxu0
          %396 = vmatpush.msra.mxu0 %v373
          %397 = vmatpush.msra.mxu0 %v369
          %398 = vmatpush.msra.mxu0 %v365
          %399 = vmatpush.msra.mxu0 %v361
          %400 = vmatpush.msra.mxu0 %v357
          %401 = vmatpush.msra.mxu0 %v353
          %402 = vmatpush.msra.mxu0 %v349
          %403 = vmatpush.msra.mxu0 %v345
          %404 = vmatpush.msra.mxu0 %v341
          %405 = vmatpush.msra.mxu0 %v337
          %406 = vmatpush.msra.mxu0 %v333
          %407 = vmatpush.msra.mxu0 %v329
          %408 = vmatpush.msra.mxu0 %v325
          %409 = vmatpush.msra.mxu0 %v321
          %410 = vmatpush.msra.mxu0 %v317
          %411 = vmatpush.msra.mxu0 %v313
          %412 = vmatmul.f32.gmra.mxu0 %v311
          %v413 = vpop.f32.mrf.mxu0
          %v414 = vadd.f32 0.0, %v413
          %415 = vdwg.mxu0
          %416 = vmatpush.msra.mxu0 %v374
          %417 = vmatpush.msra.mxu0 %v370
          %418 = vmatpush.msra.mxu0 %v366
          %419 = vmatpush.msra.mxu0 %v362
          %420 = vmatpush.msra.mxu0 %v358
          %421 = vmatpush.msra.mxu0 %v354
          %422 = vmatpush.msra.mxu0 %v350
          %423 = vmatpush.msra.mxu0 %v346
          %424 = vmatpush.msra.mxu0 %v342
          %425 = vmatpush.msra.mxu0 %v338
          %426 = vmatpush.msra.mxu0 %v334
          %427 = vmatpush.msra.mxu0 %v330
          %428 = vmatpush.msra.mxu0 %v326
          %429 = vmatpush.msra.mxu0 %v322
          %430 = vmatpush.msra.mxu0 %v318
          %431 = vmatpush.msra.mxu0 %v314
          %432 = vmatmul.f32.gmra.mxu0 %v311
          %v433 = vpop.f32.mrf.mxu0
          %v434 = vadd.f32 0.0, %v433
          %435 = vdwg.mxu0
          %436 = vmatpush.msra.mxu0 %v375
          %437 = vmatpush.msra.mxu0 %v371
          %438 = vmatpush.msra.mxu0 %v367
          %439 = vmatpush.msra.mxu0 %v363
          %440 = vmatpush.msra.mxu0 %v359
          %441 = vmatpush.msra.mxu0 %v355
          %442 = vmatpush.msra.mxu0 %v351
          %443 = vmatpush.msra.mxu0 %v347
          %444 = vmatpush.msra.mxu0 %v343
          %445 = vmatpush.msra.mxu0 %v339
          %446 = vmatpush.msra.mxu0 %v335
          %447 = vmatpush.msra.mxu0 %v331
          %448 = vmatpush.msra.mxu0 %v327
          %449 = vmatpush.msra.mxu0 %v323
          %450 = vmatpush.msra.mxu0 %v319
          %451 = vmatpush.msra.mxu0 %v315
          %452 = vmatmul.f32.gmra.mxu0 %v311
          %v453 = vpop.f32.mrf.mxu0
          %v454 = vadd.f32 0.0, %v453
          %455 = vdwg.mxu0
          %456 = vst [vmem:[#allocation2] sm:$0xff] %v394
          %457 = vst [vmem:[#allocation2 + $0x8] sm:$0xff] %v414
          %458 = vst [vmem:[#allocation2 + $0x10] sm:$0xff] %v434
          %459 = vst [vmem:[#allocation2 + $0x18] sm:$0xff] %v454
          %vm460 = vcmask 7168
          %461 = vst.msk [vmem:[#allocation3] sm:$0xff] %vm460, -inf
          %462 = vst.msk [vmem:[#allocation3 + $0x8] sm:$0xff] %vm460, -inf
          %463 = vst.msk [vmem:[#allocation3 + $0x10] sm:$0xff] %vm460, -inf
          %464 = vst.msk [vmem:[#allocation3 + $0x18] sm:$0xff] %vm460, -inf
          %465 = vst.msk [vmem:[#allocation4] sm:$0xff] %vm460, 0.0
          %466 = vst.msk [vmem:[#allocation4 + $0x8] sm:$0xff] %vm460, 0.0
          %467 = vst.msk [vmem:[#allocation4 + $0x10] sm:$0xff] %vm460, 0.0
          %468 = vst.msk [vmem:[#allocation4 + $0x18] sm:$0xff] %vm460, 0.0
          %469 = vst [vmem:[#allocation5] sm:$0xff] 0.0
          %470 = vst [vmem:[#allocation5 + $0x8] sm:$0xff] 0.0
          %471 = vst [vmem:[#allocation5 + $0x10] sm:$0xff] 0.0
          %472 = vst [vmem:[#allocation5 + $0x18] sm:$0xff] 0.0
        $region48: #{multi_head_attention.1} parent=43 // pred_fallthru
          _
        %v473 = vld [vmem:[%s306] sm:$0xff]
        %v474 = vld [vmem:[%s3] sm:$0xff]
        %v475 = vld [vmem:[%s3 + $0x8] sm:$0xff]
        %v476 = vld [vmem:[%s3 + $0x10] sm:$0xff]
        %v477 = vld [vmem:[%s3 + $0x18] sm:$0xff]
        %v478 = vld [vmem:[%s3 + $0x20] sm:$0xff]
        %v479 = vld [vmem:[%s3 + $0x28] sm:$0xff]
        %v480 = vld [vmem:[%s3 + $0x30] sm:$0xff]
        %v481 = vld [vmem:[%s3 + $0x38] sm:$0xff]
        %v482 = vld [vmem:[%s3 + $0x40] sm:$0xff]
        %v483 = vld [vmem:[%s3 + $0x48] sm:$0xff]
        %v484 = vld [vmem:[%s3 + $0x50] sm:$0xff]
        %v485 = vld [vmem:[%s3 + $0x58] sm:$0xff]
        %v486 = vld [vmem:[%s3 + $0x60] sm:$0xff]
        %v487 = vld [vmem:[%s3 + $0x68] sm:$0xff]
        %v488 = vld [vmem:[%s3 + $0x70] sm:$0xff]
        %v489 = vld [vmem:[%s3 + $0x78] sm:$0xff]
        %v490 = vld [vmem:[%s3 + $0x80] sm:$0xff]
        %v491 = vld [vmem:[%s3 + $0x88] sm:$0xff]
        %v492 = vld [vmem:[%s3 + $0x90] sm:$0xff]
        %v493 = vld [vmem:[%s3 + $0x98] sm:$0xff]
        %v494 = vld [vmem:[%s3 + $0xa0] sm:$0xff]
        %v495 = vld [vmem:[%s3 + $0xa8] sm:$0xff]
        %v496 = vld [vmem:[%s3 + $0xb0] sm:$0xff]
        %v497 = vld [vmem:[%s3 + $0xb8] sm:$0xff]
        %v498 = vld [vmem:[%s3 + $0xc0] sm:$0xff]
        %v499 = vld [vmem:[%s3 + $0xc8] sm:$0xff]
        %v500 = vld [vmem:[%s3 + $0xd0] sm:$0xff]
        %v501 = vld [vmem:[%s3 + $0xd8] sm:$0xff]
        %v502 = vld [vmem:[%s3 + $0xe0] sm:$0xff]
        %v503 = vld [vmem:[%s3 + $0xe8] sm:$0xff]
        %v504 = vld [vmem:[%s3 + $0xf0] sm:$0xff]
        %v505 = vld [vmem:[%s3 + $0xf8] sm:$0xff]
        %v506 = vld [vmem:[%s3 + $0x100] sm:$0xff]
        %v507 = vld [vmem:[%s3 + $0x108] sm:$0xff]
        %v508 = vld [vmem:[%s3 + $0x110] sm:$0xff]
        %v509 = vld [vmem:[%s3 + $0x118] sm:$0xff]
        %v510 = vld [vmem:[%s3 + $0x120] sm:$0xff]
        %v511 = vld [vmem:[%s3 + $0x128] sm:$0xff]
        %v512 = vld [vmem:[%s3 + $0x130] sm:$0xff]
        %v513 = vld [vmem:[%s3 + $0x138] sm:$0xff]
        %v514 = vld [vmem:[%s3 + $0x140] sm:$0xff]
        %v515 = vld [vmem:[%s3 + $0x148] sm:$0xff]
        %v516 = vld [vmem:[%s3 + $0x150] sm:$0xff]
        %v517 = vld [vmem:[%s3 + $0x158] sm:$0xff]
        %v518 = vld [vmem:[%s3 + $0x160] sm:$0xff]
        %v519 = vld [vmem:[%s3 + $0x168] sm:$0xff]
        %v520 = vld [vmem:[%s3 + $0x170] sm:$0xff]
        %v521 = vld [vmem:[%s3 + $0x178] sm:$0xff]
        %v522 = vld [vmem:[%s3 + $0x180] sm:$0xff]
        %v523 = vld [vmem:[%s3 + $0x188] sm:$0xff]
        %v524 = vld [vmem:[%s3 + $0x190] sm:$0xff]
        %v525 = vld [vmem:[%s3 + $0x198] sm:$0xff]
        %v526 = vld [vmem:[%s3 + $0x1a0] sm:$0xff]
        %v527 = vld [vmem:[%s3 + $0x1a8] sm:$0xff]
        %v528 = vld [vmem:[%s3 + $0x1b0] sm:$0xff]
        %v529 = vld [vmem:[%s3 + $0x1b8] sm:$0xff]
        %v530 = vld [vmem:[%s3 + $0x1c0] sm:$0xff]
        %v531 = vld [vmem:[%s3 + $0x1c8] sm:$0xff]
        %v532 = vld [vmem:[%s3 + $0x1d0] sm:$0xff]
        %v533 = vld [vmem:[%s3 + $0x1d8] sm:$0xff]
        %v534 = vld [vmem:[%s3 + $0x1e0] sm:$0xff]
        %v535 = vld [vmem:[%s3 + $0x1e8] sm:$0xff]
        %v536 = vld [vmem:[%s3 + $0x1f0] sm:$0xff]
        %v537 = vld [vmem:[%s3 + $0x1f8] sm:$0xff]
        %v538 = vld [vmem:[%s3 + $0x200] sm:$0xff]
        %v539 = vld [vmem:[%s3 + $0x208] sm:$0xff]
        %v540 = vld [vmem:[%s3 + $0x210] sm:$0xff]
        %v541 = vld [vmem:[%s3 + $0x218] sm:$0xff]
        %v542 = vld [vmem:[%s3 + $0x220] sm:$0xff]
        %v543 = vld [vmem:[%s3 + $0x228] sm:$0xff]
        %v544 = vld [vmem:[%s3 + $0x230] sm:$0xff]
        %v545 = vld [vmem:[%s3 + $0x238] sm:$0xff]
        %v546 = vld [vmem:[%s3 + $0x240] sm:$0xff]
        %v547 = vld [vmem:[%s3 + $0x248] sm:$0xff]
        %v548 = vld [vmem:[%s3 + $0x250] sm:$0xff]
        %v549 = vld [vmem:[%s3 + $0x258] sm:$0xff]
        %v550 = vld [vmem:[%s3 + $0x260] sm:$0xff]
        %v551 = vld [vmem:[%s3 + $0x268] sm:$0xff]
        %v552 = vld [vmem:[%s3 + $0x270] sm:$0xff]
        %v553 = vld [vmem:[%s3 + $0x278] sm:$0xff]
        %v554 = vld [vmem:[%s3 + $0x280] sm:$0xff]
        %v555 = vld [vmem:[%s3 + $0x288] sm:$0xff]
        %v556 = vld [vmem:[%s3 + $0x290] sm:$0xff]
        %v557 = vld [vmem:[%s3 + $0x298] sm:$0xff]
        %v558 = vld [vmem:[%s3 + $0x2a0] sm:$0xff]
        %v559 = vld [vmem:[%s3 + $0x2a8] sm:$0xff]
        %v560 = vld [vmem:[%s3 + $0x2b0] sm:$0xff]
        %v561 = vld [vmem:[%s3 + $0x2b8] sm:$0xff]
        %v562 = vld [vmem:[%s3 + $0x2c0] sm:$0xff]
        %v563 = vld [vmem:[%s3 + $0x2c8] sm:$0xff]
        %v564 = vld [vmem:[%s3 + $0x2d0] sm:$0xff]
        %v565 = vld [vmem:[%s3 + $0x2d8] sm:$0xff]
        %v566 = vld [vmem:[%s3 + $0x2e0] sm:$0xff]
        %v567 = vld [vmem:[%s3 + $0x2e8] sm:$0xff]
        %v568 = vld [vmem:[%s3 + $0x2f0] sm:$0xff]
        %v569 = vld [vmem:[%s3 + $0x2f8] sm:$0xff]
        %v570 = vld [vmem:[%s3 + $0x300] sm:$0xff]
        %v571 = vld [vmem:[%s3 + $0x308] sm:$0xff]
        %v572 = vld [vmem:[%s3 + $0x310] sm:$0xff]
        %v573 = vld [vmem:[%s3 + $0x318] sm:$0xff]
        %v574 = vld [vmem:[%s3 + $0x320] sm:$0xff]
        %v575 = vld [vmem:[%s3 + $0x328] sm:$0xff]
        %v576 = vld [vmem:[%s3 + $0x330] sm:$0xff]
        %v577 = vld [vmem:[%s3 + $0x338] sm:$0xff]
        %v578 = vld [vmem:[%s3 + $0x340] sm:$0xff]
        %v579 = vld [vmem:[%s3 + $0x348] sm:$0xff]
        %v580 = vld [vmem:[%s3 + $0x350] sm:$0xff]
        %v581 = vld [vmem:[%s3 + $0x358] sm:$0xff]
        %v582 = vld [vmem:[%s3 + $0x360] sm:$0xff]
        %v583 = vld [vmem:[%s3 + $0x368] sm:$0xff]
        %v584 = vld [vmem:[%s3 + $0x370] sm:$0xff]
        %v585 = vld [vmem:[%s3 + $0x378] sm:$0xff]
        %v586 = vld [vmem:[%s3 + $0x380] sm:$0xff]
        %v587 = vld [vmem:[%s3 + $0x388] sm:$0xff]
        %v588 = vld [vmem:[%s3 + $0x390] sm:$0xff]
        %v589 = vld [vmem:[%s3 + $0x398] sm:$0xff]
        %v590 = vld [vmem:[%s3 + $0x3a0] sm:$0xff]
        %v591 = vld [vmem:[%s3 + $0x3a8] sm:$0xff]
        %v592 = vld [vmem:[%s3 + $0x3b0] sm:$0xff]
        %v593 = vld [vmem:[%s3 + $0x3b8] sm:$0xff]
        %v594 = vld [vmem:[%s3 + $0x3c0] sm:$0xff]
        %v595 = vld [vmem:[%s3 + $0x3c8] sm:$0xff]
        %v596 = vld [vmem:[%s3 + $0x3d0] sm:$0xff]
        %v597 = vld [vmem:[%s3 + $0x3d8] sm:$0xff]
        %v598 = vld [vmem:[%s3 + $0x3e0] sm:$0xff]
        %v599 = vld [vmem:[%s3 + $0x3e8] sm:$0xff]
        %v600 = vld [vmem:[%s3 + $0x3f0] sm:$0xff]
        %v601 = vld [vmem:[%s3 + $0x3f8] sm:$0xff]
        %602 = vmatpush.msra.mxu0 %v594
        %603 = vmatpush.msra.mxu0 %v586
        %604 = vmatpush.msra.mxu0 %v578
        %605 = vmatpush.msra.mxu0 %v570
        %606 = vmatpush.msra.mxu0 %v562
        %607 = vmatpush.msra.mxu0 %v554
        %608 = vmatpush.msra.mxu0 %v546
        %609 = vmatpush.msra.mxu0 %v538
        %610 = vmatpush.msra.mxu0 %v530
        %611 = vmatpush.msra.mxu0 %v522
        %612 = vmatpush.msra.mxu0 %v514
        %613 = vmatpush.msra.mxu0 %v506
        %614 = vmatpush.msra.mxu0 %v498
        %615 = vmatpush.msra.mxu0 %v490
        %616 = vmatpush.msra.mxu0 %v482
        %617 = vmatpush.msra.mxu0 %v474
        %618 = vmatmul.f32.gmra.mxu0 %v473
        %v619 = vpop.f32.mrf.mxu0
        %v620 = vadd.f32 0.0, %v619
        %621 = vdwg.mxu0
        %622 = vmatpush.msra.mxu0 %v595
        %623 = vmatpush.msra.mxu0 %v587
        %624 = vmatpush.msra.mxu0 %v579
        %625 = vmatpush.msra.mxu0 %v571
        %626 = vmatpush.msra.mxu0 %v563
        %627 = vmatpush.msra.mxu0 %v555
        %628 = vmatpush.msra.mxu0 %v547
        %629 = vmatpush.msra.mxu0 %v539
        %630 = vmatpush.msra.mxu0 %v531
        %631 = vmatpush.msra.mxu0 %v523
        %632 = vmatpush.msra.mxu0 %v515
        %633 = vmatpush.msra.mxu0 %v507
        %634 = vmatpush.msra.mxu0 %v499
        %635 = vmatpush.msra.mxu0 %v491
        %636 = vmatpush.msra.mxu0 %v483
        %637 = vmatpush.msra.mxu0 %v475
        %638 = vmatmul.f32.gmra.mxu0 %v473
        %v639 = vpop.f32.mrf.mxu0
        %v640 = vadd.f32 0.0, %v639
        %641 = vdwg.mxu0
        %642 = vmatpush.msra.mxu0 %v596
        %643 = vmatpush.msra.mxu0 %v588
        %644 = vmatpush.msra.mxu0 %v580
        %645 = vmatpush.msra.mxu0 %v572
        %646 = vmatpush.msra.mxu0 %v564
        %647 = vmatpush.msra.mxu0 %v556
        %648 = vmatpush.msra.mxu0 %v548
        %649 = vmatpush.msra.mxu0 %v540
        %650 = vmatpush.msra.mxu0 %v532
        %651 = vmatpush.msra.mxu0 %v524
        %652 = vmatpush.msra.mxu0 %v516
        %653 = vmatpush.msra.mxu0 %v508
        %654 = vmatpush.msra.mxu0 %v500
        %655 = vmatpush.msra.mxu0 %v492
        %656 = vmatpush.msra.mxu0 %v484
        %657 = vmatpush.msra.mxu0 %v476
        %658 = vmatmul.f32.gmra.mxu0 %v473
        %v659 = vpop.f32.mrf.mxu0
        %v660 = vadd.f32 0.0, %v659
        %661 = vdwg.mxu0
        %662 = vmatpush.msra.mxu0 %v597
        %663 = vmatpush.msra.mxu0 %v589
        %664 = vmatpush.msra.mxu0 %v581
        %665 = vmatpush.msra.mxu0 %v573
        %666 = vmatpush.msra.mxu0 %v565
        %667 = vmatpush.msra.mxu0 %v557
        %668 = vmatpush.msra.mxu0 %v549
        %669 = vmatpush.msra.mxu0 %v541
        %670 = vmatpush.msra.mxu0 %v533
        %671 = vmatpush.msra.mxu0 %v525
        %672 = vmatpush.msra.mxu0 %v517
        %673 = vmatpush.msra.mxu0 %v509
        %674 = vmatpush.msra.mxu0 %v501
        %675 = vmatpush.msra.mxu0 %v493
        %676 = vmatpush.msra.mxu0 %v485
        %677 = vmatpush.msra.mxu0 %v477
        %678 = vmatmul.f32.gmra.mxu0 %v473
        %v679 = vpop.f32.mrf.mxu0
        %v680 = vadd.f32 0.0, %v679
        %681 = vdwg.mxu0
        %682 = vmatpush.msra.mxu0 %v598
        %683 = vmatpush.msra.mxu0 %v590
        %684 = vmatpush.msra.mxu0 %v582
        %685 = vmatpush.msra.mxu0 %v574
        %686 = vmatpush.msra.mxu0 %v566
        %687 = vmatpush.msra.mxu0 %v558
        %688 = vmatpush.msra.mxu0 %v550
        %689 = vmatpush.msra.mxu0 %v542
        %690 = vmatpush.msra.mxu0 %v534
        %691 = vmatpush.msra.mxu0 %v526
        %692 = vmatpush.msra.mxu0 %v518
        %693 = vmatpush.msra.mxu0 %v510
        %694 = vmatpush.msra.mxu0 %v502
        %695 = vmatpush.msra.mxu0 %v494
        %696 = vmatpush.msra.mxu0 %v486
        %697 = vmatpush.msra.mxu0 %v478
        %698 = vmatmul.f32.gmra.mxu0 %v473
        %v699 = vpop.f32.mrf.mxu0
        %v700 = vadd.f32 0.0, %v699
        %701 = vdwg.mxu0
        %702 = vmatpush.msra.mxu0 %v599
        %703 = vmatpush.msra.mxu0 %v591
        %704 = vmatpush.msra.mxu0 %v583
        %705 = vmatpush.msra.mxu0 %v575
        %706 = vmatpush.msra.mxu0 %v567
        %707 = vmatpush.msra.mxu0 %v559
        %708 = vmatpush.msra.mxu0 %v551
        %709 = vmatpush.msra.mxu0 %v543
        %710 = vmatpush.msra.mxu0 %v535
        %711 = vmatpush.msra.mxu0 %v527
        %712 = vmatpush.msra.mxu0 %v519
        %713 = vmatpush.msra.mxu0 %v511
        %714 = vmatpush.msra.mxu0 %v503
        %715 = vmatpush.msra.mxu0 %v495
        %716 = vmatpush.msra.mxu0 %v487
        %717 = vmatpush.msra.mxu0 %v479
        %718 = vmatmul.f32.gmra.mxu0 %v473
        %v719 = vpop.f32.mrf.mxu0
        %v720 = vadd.f32 0.0, %v719
        %721 = vdwg.mxu0
        %722 = vmatpush.msra.mxu0 %v600
        %723 = vmatpush.msra.mxu0 %v592
        %724 = vmatpush.msra.mxu0 %v584
        %725 = vmatpush.msra.mxu0 %v576
        %726 = vmatpush.msra.mxu0 %v568
        %727 = vmatpush.msra.mxu0 %v560
        %728 = vmatpush.msra.mxu0 %v552
        %729 = vmatpush.msra.mxu0 %v544
        %730 = vmatpush.msra.mxu0 %v536
        %731 = vmatpush.msra.mxu0 %v528
        %732 = vmatpush.msra.mxu0 %v520
        %733 = vmatpush.msra.mxu0 %v512
        %734 = vmatpush.msra.mxu0 %v504
        %735 = vmatpush.msra.mxu0 %v496
        %736 = vmatpush.msra.mxu0 %v488
        %737 = vmatpush.msra.mxu0 %v480
        %738 = vmatmul.f32.gmra.mxu0 %v473
        %v739 = vpop.f32.mrf.mxu0
        %v740 = vadd.f32 0.0, %v739
        %741 = vdwg.mxu0
        %742 = vmatpush.msra.mxu0 %v601
        %743 = vmatpush.msra.mxu0 %v593
        %744 = vmatpush.msra.mxu0 %v585
        %745 = vmatpush.msra.mxu0 %v577
        %746 = vmatpush.msra.mxu0 %v569
        %747 = vmatpush.msra.mxu0 %v561
        %748 = vmatpush.msra.mxu0 %v553
        %749 = vmatpush.msra.mxu0 %v545
        %750 = vmatpush.msra.mxu0 %v537
        %751 = vmatpush.msra.mxu0 %v529
        %752 = vmatpush.msra.mxu0 %v521
        %753 = vmatpush.msra.mxu0 %v513
        %754 = vmatpush.msra.mxu0 %v505
        %755 = vmatpush.msra.mxu0 %v497
        %756 = vmatpush.msra.mxu0 %v489
        %757 = vmatpush.msra.mxu0 %v481
        %758 = vmatmul.f32.gmra.mxu0 %v473
        %v759 = vpop.f32.mrf.mxu0
        %v760 = vadd.f32 0.0, %v759
        %761 = vdwg.mxu0
        %v762 = vld [vmem:[#allocation2] sm:$0xff]
        %763 = vmatpush.xpose.msra.mxu0 0.0
        %764 = vmatpush.xpose.msra.mxu0 0.0
        %765 = vmatpush.xpose.msra.mxu0 0.0
        %766 = vmatpush.xpose.msra.mxu0 0.0
        %767 = vmatpush.xpose.msra.mxu0 0.0
        %768 = vmatpush.xpose.msra.mxu0 0.0
        %769 = vmatpush.xpose.msra.mxu0 0.0
        %770 = vmatpush.xpose.msra.mxu0 0.0
        %771 = vmatpush.xpose.msra.mxu0 0.0
        %772 = vmatpush.xpose.msra.mxu0 0.0
        %773 = vmatpush.xpose.msra.mxu0 0.0
        %774 = vmatpush.xpose.msra.mxu0 0.0
        %775 = vmatpush.xpose.msra.mxu0 0.0
        %776 = vmatpush.xpose.msra.mxu0 0.0
        %777 = vmatpush.xpose.msra.mxu0 0.0
        %778 = vmatpush.xpose.msra.mxu0 %v620
        %779 = vmatmul.f32.gmra.mxu0 %v762
        %v780 = vpop.f32.mrf.mxu0
        %v781 = vadd.f32 0.0, %v780
        %782 = vdwg.mxu0
        %v783 = vld [vmem:[#allocation3] sm:$0xff]
        %vm784 = vcmask 64512
        %v785 = vsel %vm784, %v781, -inf
        %786 = vmax.xlane.f32.xlu0 %v785
        %v787 = vpop.xlane.xlu0 %786
        %v788 = vmax.f32 %v783, %v787
        %v789 = vsub.f32 %v783, %v788
        %v790 = vmul.f32 %v789, 1.442695
        %v791 = vpow.pop %v790
        %793 = vset.pattern.permute.xlu0 0
        %794 = vperm.xlu0 %793, %v788
        %v795 = vpop.permute.xlu0 %794
        %v797 = vsub.f32 %v781, %v795
        %v798 = vmul.f32 %v797, 1.442695
        %v799 = vpow.pop %v798
        %v800 = vld [vmem:[#allocation4] sm:$0xff]
        %v801 = vmul.f32 %v791, %v800
        %v802 = vsel %vm784, %v799, 0.0
        %803 = vadd.xlane.f32.xlu0 %v802
        %v804 = vpop.xlane.xlu0 %803
        %v805 = vadd.f32 %v801, %v804
        %vm806 = vcmask 7168
        %807 = vst.msk [vmem:[#allocation4] sm:$0xff] %vm806, %v805
        %v808 = vld [vmem:[#allocation5] sm:$0xff]
        %810 = vset.pattern.permute.xlu0 0
        %811 = vperm.xlu0 %810, %v791
        %v812 = vpop.permute.xlu0 %811
        %v814 = vmul.f32 %v812, %v808
        %v816 = vsel %vm784, %v799, 0
        %818 = vmatpush.msra.mxu0 0.0
        %819 = vmatpush.msra.mxu0 0.0
        %820 = vmatpush.msra.mxu0 0.0
        %821 = vmatpush.msra.mxu0 0.0
        %822 = vmatpush.msra.mxu0 0.0
        %823 = vmatpush.msra.mxu0 0.0
        %824 = vmatpush.msra.mxu0 0.0
        %825 = vmatpush.msra.mxu0 0.0
        %826 = vmatpush.msra.mxu0 0.0
        %827 = vmatpush.msra.mxu0 0.0
        %828 = vmatpush.msra.mxu0 0.0
        %829 = vmatpush.msra.mxu0 0.0
        %830 = vmatpush.msra.mxu0 0.0
        %831 = vmatpush.msra.mxu0 0.0
        %832 = vmatpush.msra.mxu0 0.0
        %833 = vmatpush.msra.mxu0 %v700
        %834 = vmatmul.f32.gmra.mxu0 %v816
        %v835 = vpop.f32.mrf.mxu0
        %v836 = vadd.f32 0.0, %v835
        %837 = vdwg.mxu0
        %v838 = vadd.f32 %v814, %v836
        %839 = vst [vmem:[#allocation5] sm:$0xff] %v838
        %840 = vst.msk [vmem:[#allocation3] sm:$0xff] %vm806, %v788
        %v841 = vld [vmem:[#allocation2 + $0x8] sm:$0xff]
        %842 = vmatpush.xpose.msra.mxu0 0.0
        %843 = vmatpush.xpose.msra.mxu0 0.0
        %844 = vmatpush.xpose.msra.mxu0 0.0
        %845 = vmatpush.xpose.msra.mxu0 0.0
        %846 = vmatpush.xpose.msra.mxu0 0.0
        %847 = vmatpush.xpose.msra.mxu0 0.0
        %848 = vmatpush.xpose.msra.mxu0 0.0
        %849 = vmatpush.xpose.msra.mxu0 0.0
        %850 = vmatpush.xpose.msra.mxu0 0.0
        %851 = vmatpush.xpose.msra.mxu0 0.0
        %852 = vmatpush.xpose.msra.mxu0 0.0
        %853 = vmatpush.xpose.msra.mxu0 0.0
        %854 = vmatpush.xpose.msra.mxu0 0.0
        %855 = vmatpush.xpose.msra.mxu0 0.0
        %856 = vmatpush.xpose.msra.mxu0 0.0
        %857 = vmatpush.xpose.msra.mxu0 %v640
        %858 = vmatmul.f32.gmra.mxu0 %v841
        %v859 = vpop.f32.mrf.mxu0
        %v860 = vadd.f32 0.0, %v859
        %861 = vdwg.mxu0
        %s862 = scalar_lea.vmem [#allocation3], 8
        %v863 = vld [vmem:[%s862] sm:$0xff]
        %v864 = vsel %vm784, %v860, -inf
        %865 = vmax.xlane.f32.xlu0 %v864
        %v866 = vpop.xlane.xlu0 %865
        %v867 = vmax.f32 %v863, %v866
        %v868 = vsub.f32 %v863, %v867
        %v869 = vmul.f32 %v868, 1.442695
        %v870 = vpow.pop %v869
        %872 = vset.pattern.permute.xlu0 0
        %873 = vperm.xlu0 %872, %v867
        %v874 = vpop.permute.xlu0 %873
        %v876 = vsub.f32 %v860, %v874
        %v877 = vmul.f32 %v876, 1.442695
        %v878 = vpow.pop %v877
        %s879 = scalar_lea.vmem [#allocation4], 8
        %v880 = vld [vmem:[%s879] sm:$0xff]
        %v881 = vmul.f32 %v870, %v880
        %v882 = vsel %vm784, %v878, 0.0
        %883 = vadd.xlane.f32.xlu0 %v882
        %v884 = vpop.xlane.xlu0 %883
        %v885 = vadd.f32 %v881, %v884
        %886 = vst.msk [vmem:[%s879] sm:$0xff] %vm806, %v885
        %s887 = scalar_lea.vmem [#allocation5], 8
        %v888 = vld [vmem:[%s887] sm:$0xff]
        %890 = vset.pattern.permute.xlu0 0
        %891 = vperm.xlu0 %890, %v870
        %v892 = vpop.permute.xlu0 %891
        %v894 = vmul.f32 %v892, %v888
        %v896 = vsel %vm784, %v878, 0
        %898 = vmatpush.msra.mxu0 0.0
        %899 = vmatpush.msra.mxu0 0.0
        %900 = vmatpush.msra.mxu0 0.0
        %901 = vmatpush.msra.mxu0 0.0
        %902 = vmatpush.msra.mxu0 0.0
        %903 = vmatpush.msra.mxu0 0.0
        %904 = vmatpush.msra.mxu0 0.0
        %905 = vmatpush.msra.mxu0 0.0
        %906 = vmatpush.msra.mxu0 0.0
        %907 = vmatpush.msra.mxu0 0.0
        %908 = vmatpush.msra.mxu0 0.0
        %909 = vmatpush.msra.mxu0 0.0
        %910 = vmatpush.msra.mxu0 0.0
        %911 = vmatpush.msra.mxu0 0.0
        %912 = vmatpush.msra.mxu0 0.0
        %913 = vmatpush.msra.mxu0 %v720
        %914 = vmatmul.f32.gmra.mxu0 %v896
        %v915 = vpop.f32.mrf.mxu0
        %v916 = vadd.f32 0.0, %v915
        %917 = vdwg.mxu0
        %v918 = vadd.f32 %v894, %v916
        %919 = vst [vmem:[%s887] sm:$0xff] %v918
        %920 = vst.msk [vmem:[%s862] sm:$0xff] %vm806, %v867
        %v921 = vld [vmem:[#allocation2 + $0x10] sm:$0xff]
        %922 = vmatpush.xpose.msra.mxu0 0.0
        %923 = vmatpush.xpose.msra.mxu0 0.0
        %924 = vmatpush.xpose.msra.mxu0 0.0
        %925 = vmatpush.xpose.msra.mxu0 0.0
        %926 = vmatpush.xpose.msra.mxu0 0.0
        %927 = vmatpush.xpose.msra.mxu0 0.0
        %928 = vmatpush.xpose.msra.mxu0 0.0
        %929 = vmatpush.xpose.msra.mxu0 0.0
        %930 = vmatpush.xpose.msra.mxu0 0.0
        %931 = vmatpush.xpose.msra.mxu0 0.0
        %932 = vmatpush.xpose.msra.mxu0 0.0
        %933 = vmatpush.xpose.msra.mxu0 0.0
        %934 = vmatpush.xpose.msra.mxu0 0.0
        %935 = vmatpush.xpose.msra.mxu0 0.0
        %936 = vmatpush.xpose.msra.mxu0 0.0
        %937 = vmatpush.xpose.msra.mxu0 %v660
        %938 = vmatmul.f32.gmra.mxu0 %v921
        %v939 = vpop.f32.mrf.mxu0
        %v940 = vadd.f32 0.0, %v939
        %941 = vdwg.mxu0
        %s942 = scalar_lea.vmem [#allocation3], 16
        %v943 = vld [vmem:[%s942] sm:$0xff]
        %v944 = vsel %vm784, %v940, -inf
        %945 = vmax.xlane.f32.xlu0 %v944
        %v946 = vpop.xlane.xlu0 %945
        %v947 = vmax.f32 %v943, %v946
        %v948 = vsub.f32 %v943, %v947
        %v949 = vmul.f32 %v948, 1.442695
        %v950 = vpow.pop %v949
        %952 = vset.pattern.permute.xlu0 0
        %953 = vperm.xlu0 %952, %v947
        %v954 = vpop.permute.xlu0 %953
        %v956 = vsub.f32 %v940, %v954
        %v957 = vmul.f32 %v956, 1.442695
        %v958 = vpow.pop %v957
        %s959 = scalar_lea.vmem [#allocation4], 16
        %v960 = vld [vmem:[%s959] sm:$0xff]
        %v961 = vmul.f32 %v950, %v960
        %v962 = vsel %vm784, %v958, 0.0
        %963 = vadd.xlane.f32.xlu0 %v962
        %v964 = vpop.xlane.xlu0 %963
        %v965 = vadd.f32 %v961, %v964
        %966 = vst.msk [vmem:[%s959] sm:$0xff] %vm806, %v965
        %s967 = scalar_lea.vmem [#allocation5], 16
        %v968 = vld [vmem:[%s967] sm:$0xff]
        %970 = vset.pattern.permute.xlu0 0
        %971 = vperm.xlu0 %970, %v950
        %v972 = vpop.permute.xlu0 %971
        %v974 = vmul.f32 %v972, %v968
        %v976 = vsel %vm784, %v958, 0
        %978 = vmatpush.msra.mxu0 0.0
        %979 = vmatpush.msra.mxu0 0.0
        %980 = vmatpush.msra.mxu0 0.0
        %981 = vmatpush.msra.mxu0 0.0
        %982 = vmatpush.msra.mxu0 0.0
        %983 = vmatpush.msra.mxu0 0.0
        %984 = vmatpush.msra.mxu0 0.0
        %985 = vmatpush.msra.mxu0 0.0
        %986 = vmatpush.msra.mxu0 0.0
        %987 = vmatpush.msra.mxu0 0.0
        %988 = vmatpush.msra.mxu0 0.0
        %989 = vmatpush.msra.mxu0 0.0
        %990 = vmatpush.msra.mxu0 0.0
        %991 = vmatpush.msra.mxu0 0.0
        %992 = vmatpush.msra.mxu0 0.0
        %993 = vmatpush.msra.mxu0 %v740
        %994 = vmatmul.f32.gmra.mxu0 %v976
        %v995 = vpop.f32.mrf.mxu0
        %v996 = vadd.f32 0.0, %v995
        %997 = vdwg.mxu0
        %v998 = vadd.f32 %v974, %v996
        %999 = vst [vmem:[%s967] sm:$0xff] %v998
        %1000 = vst.msk [vmem:[%s942] sm:$0xff] %vm806, %v947
        %v1001 = vld [vmem:[#allocation2 + $0x18] sm:$0xff]
        %1002 = vmatpush.xpose.msra.mxu0 0.0
        %1003 = vmatpush.xpose.msra.mxu0 0.0
        %1004 = vmatpush.xpose.msra.mxu0 0.0
        %1005 = vmatpush.xpose.msra.mxu0 0.0
        %1006 = vmatpush.xpose.msra.mxu0 0.0
        %1007 = vmatpush.xpose.msra.mxu0 0.0
        %1008 = vmatpush.xpose.msra.mxu0 0.0
        %1009 = vmatpush.xpose.msra.mxu0 0.0
        %1010 = vmatpush.xpose.msra.mxu0 0.0
        %1011 = vmatpush.xpose.msra.mxu0 0.0
        %1012 = vmatpush.xpose.msra.mxu0 0.0
        %1013 = vmatpush.xpose.msra.mxu0 0.0
        %1014 = vmatpush.xpose.msra.mxu0 0.0
        %1015 = vmatpush.xpose.msra.mxu0 0.0
        %1016 = vmatpush.xpose.msra.mxu0 0.0
        %1017 = vmatpush.xpose.msra.mxu0 %v680
        %1018 = vmatmul.f32.gmra.mxu0 %v1001
        %v1019 = vpop.f32.mrf.mxu0
        %v1020 = vadd.f32 0.0, %v1019
        %1021 = vdwg.mxu0
        %s1022 = scalar_lea.vmem [#allocation3], 24
        %v1023 = vld [vmem:[%s1022] sm:$0xff]
        %v1024 = vsel %vm784, %v1020, -inf
        %1025 = vmax.xlane.f32.xlu0 %v1024
        %v1026 = vpop.xlane.xlu0 %1025
        %v1027 = vmax.f32 %v1023, %v1026
        %v1028 = vsub.f32 %v1023, %v1027
        %v1029 = vmul.f32 %v1028, 1.442695
        %v1030 = vpow.pop %v1029
        %1032 = vset.pattern.permute.xlu0 0
        %1033 = vperm.xlu0 %1032, %v1027
        %v1034 = vpop.permute.xlu0 %1033
        %v1036 = vsub.f32 %v1020, %v1034
        %v1037 = vmul.f32 %v1036, 1.442695
        %v1038 = vpow.pop %v1037
        %s1039 = scalar_lea.vmem [#allocation4], 24
        %v1040 = vld [vmem:[%s1039] sm:$0xff]
        %v1041 = vmul.f32 %v1030, %v1040
        %v1042 = vsel %vm784, %v1038, 0.0
        %1043 = vadd.xlane.f32.xlu0 %v1042
        %v1044 = vpop.xlane.xlu0 %1043
        %v1045 = vadd.f32 %v1041, %v1044
        %1046 = vst.msk [vmem:[%s1039] sm:$0xff] %vm806, %v1045
        %s1047 = scalar_lea.vmem [#allocation5], 24
        %v1048 = vld [vmem:[%s1047] sm:$0xff]
        %1050 = vset.pattern.permute.xlu0 0
        %1051 = vperm.xlu0 %1050, %v1030
        %v1052 = vpop.permute.xlu0 %1051
        %v1054 = vmul.f32 %v1052, %v1048
        %v1056 = vsel %vm784, %v1038, 0
        %1058 = vmatpush.msra.mxu0 0.0
        %1059 = vmatpush.msra.mxu0 0.0
        %1060 = vmatpush.msra.mxu0 0.0
        %1061 = vmatpush.msra.mxu0 0.0
        %1062 = vmatpush.msra.mxu0 0.0
        %1063 = vmatpush.msra.mxu0 0.0
        %1064 = vmatpush.msra.mxu0 0.0
        %1065 = vmatpush.msra.mxu0 0.0
        %1066 = vmatpush.msra.mxu0 0.0
        %1067 = vmatpush.msra.mxu0 0.0
        %1068 = vmatpush.msra.mxu0 0.0
        %1069 = vmatpush.msra.mxu0 0.0
        %1070 = vmatpush.msra.mxu0 0.0
        %1071 = vmatpush.msra.mxu0 0.0
        %1072 = vmatpush.msra.mxu0 0.0
        %1073 = vmatpush.msra.mxu0 %v760
        %1074 = vmatmul.f32.gmra.mxu0 %v1056
        %v1075 = vpop.f32.mrf.mxu0
        %v1076 = vadd.f32 0.0, %v1075
        %1077 = vdwg.mxu0
        %v1078 = vadd.f32 %v1054, %v1076
        %1079 = vst [vmem:[%s1047] sm:$0xff] %v1078
        %1080 = vst.msk [vmem:[%s1022] sm:$0xff] %vm806, %v1027
        // Predicated region
        $region49: #{multi_head_attention.1} parent=43 // pred_check
          %p1081 = pneg %p307
        $region50: #{multi_head_attention.1} parent=43 // pred_check_branch
          %1083 = sbr.rel (%p1081) target = $region52
        $region51: #{multi_head_attention.1} parent=43 // pred_region
          %v1084 = vld [vmem:[%s5] sm:$0x1]
          %v1085 = vld [vmem:[#allocation5] sm:$0xff]
          %v1086 = vld [vmem:[#allocation4] sm:$0xff]
          %1088 = vset.pattern.permute.xlu0 0
          %1089 = vperm.xlu0 %1088, %v1086
          %v1090 = vpop.permute.xlu0 %1089
          %v1092 = vrcp.pop %v1090
          %v1093 = vmul.f32 %v1090, %v1092
          %v1094 = vsub.f32 1.0, %v1093
          %v1095 = vmul.f32 %v1092, %v1094
          %v1096 = vadd.f32 %v1092, %v1095
          %vm1097 = vweird.f32 %v1090
          %vm1098 = vweird.f32 %v1092
          %vm1099 = vmor %vm1097, %vm1098
          %v1100 = vsel %vm1099, %v1092, %v1096
          %v1101 = vand.u32 2147483647, %v1090
          %vm1102 = vcmp.eq.f32.partialorder %v1101, 8.507059e+37
          %v1103 = vand.u32 %v1090, 2147483648
          %v1104 = vor.u32 1.1754944e-38, %v1103
          %v1105 = vsel %vm1102, %v1104, %v1100
          %v1106 = vmul.f32 %v1085, %v1105
          %v1107 = vld [vmem:[%s4] sm:$0xff]
          %v1108 = vld [vmem:[%s4 + $0x8] sm:$0xff]
          %v1109 = vld [vmem:[%s4 + $0x10] sm:$0xff]
          %v1110 = vld [vmem:[%s4 + $0x18] sm:$0xff]
          %v1111 = vld [vmem:[%s4 + $0x20] sm:$0xff]
          %v1112 = vld [vmem:[%s4 + $0x28] sm:$0xff]
          %v1113 = vld [vmem:[%s4 + $0x30] sm:$0xff]
          %v1114 = vld [vmem:[%s4 + $0x38] sm:$0xff]
          %v1115 = vld [vmem:[%s4 + $0x40] sm:$0xff]
          %v1116 = vld [vmem:[%s4 + $0x48] sm:$0xff]
          %v1117 = vld [vmem:[%s4 + $0x50] sm:$0xff]
          %v1118 = vld [vmem:[%s4 + $0x58] sm:$0xff]
          %v1119 = vld [vmem:[%s4 + $0x60] sm:$0xff]
          %v1120 = vld [vmem:[%s4 + $0x68] sm:$0xff]
          %v1121 = vld [vmem:[%s4 + $0x70] sm:$0xff]
          %v1122 = vld [vmem:[%s4 + $0x78] sm:$0xff]
          %1123 = vmatpush.msra.mxu0 %v1122
          %1124 = vmatpush.msra.mxu0 %v1121
          %1125 = vmatpush.msra.mxu0 %v1120
          %1126 = vmatpush.msra.mxu0 %v1119
          %1127 = vmatpush.msra.mxu0 %v1118
          %1128 = vmatpush.msra.mxu0 %v1117
          %1129 = vmatpush.msra.mxu0 %v1116
          %1130 = vmatpush.msra.mxu0 %v1115
          %1131 = vmatpush.msra.mxu0 %v1114
          %1132 = vmatpush.msra.mxu0 %v1113
          %1133 = vmatpush.msra.mxu0 %v1112
          %1134 = vmatpush.msra.mxu0 %v1111
          %1135 = vmatpush.msra.mxu0 %v1110
          %1136 = vmatpush.msra.mxu0 %v1109
          %1137 = vmatpush.msra.mxu0 %v1108
          %1138 = vmatpush.msra.mxu0 %v1107
          %1139 = vmatmul.f32.gmra.mxu0 %v1106
          %v1140 = vpop.f32.mrf.mxu0
          %v1141 = vadd.f32 0.0, %v1140
          %1142 = vdwg.mxu0
          %v1144 = vperm.slane %v1084, 0
          %v1146 = vadd.f32 %v1144, %v1141
          %v1147 = vld [vmem:[%s887] sm:$0xff]
          %v1148 = vld [vmem:[%s879] sm:$0xff]
          %1150 = vset.pattern.permute.xlu0 0
          %1151 = vperm.xlu0 %1150, %v1148
          %v1152 = vpop.permute.xlu0 %1151
          %v1154 = vrcp.pop %v1152
          %v1155 = vmul.f32 %v1152, %v1154
          %v1156 = vsub.f32 1.0, %v1155
          %v1157 = vmul.f32 %v1154, %v1156
          %v1158 = vadd.f32 %v1154, %v1157
          %vm1159 = vweird.f32 %v1152
          %vm1160 = vweird.f32 %v1154
          %vm1161 = vmor %vm1159, %vm1160
          %v1162 = vsel %vm1161, %v1154, %v1158
          %v1163 = vand.u32 2147483647, %v1152
          %vm1164 = vcmp.eq.f32.partialorder %v1163, 8.507059e+37
          %v1165 = vand.u32 %v1152, 2147483648
          %v1166 = vor.u32 1.1754944e-38, %v1165
          %v1167 = vsel %vm1164, %v1166, %v1162
          %v1168 = vmul.f32 %v1147, %v1167
          %v1169 = vld [vmem:[%s4 + $0x80] sm:$0xff]
          %v1170 = vld [vmem:[%s4 + $0x88] sm:$0xff]
          %v1171 = vld [vmem:[%s4 + $0x90] sm:$0xff]
          %v1172 = vld [vmem:[%s4 + $0x98] sm:$0xff]
          %v1173 = vld [vmem:[%s4 + $0xa0] sm:$0xff]
          %v1174 = vld [vmem:[%s4 + $0xa8] sm:$0xff]
          %v1175 = vld [vmem:[%s4 + $0xb0] sm:$0xff]
          %v1176 = vld [vmem:[%s4 + $0xb8] sm:$0xff]
          %v1177 = vld [vmem:[%s4 + $0xc0] sm:$0xff]
          %v1178 = vld [vmem:[%s4 + $0xc8] sm:$0xff]
          %v1179 = vld [vmem:[%s4 + $0xd0] sm:$0xff]
          %v1180 = vld [vmem:[%s4 + $0xd8] sm:$0xff]
          %v1181 = vld [vmem:[%s4 + $0xe0] sm:$0xff]
          %v1182 = vld [vmem:[%s4 + $0xe8] sm:$0xff]
          %v1183 = vld [vmem:[%s4 + $0xf0] sm:$0xff]
          %v1184 = vld [vmem:[%s4 + $0xf8] sm:$0xff]
          %1185 = vmatpush.msra.mxu0 %v1184
          %1186 = vmatpush.msra.mxu0 %v1183
          %1187 = vmatpush.msra.mxu0 %v1182
          %1188 = vmatpush.msra.mxu0 %v1181
          %1189 = vmatpush.msra.mxu0 %v1180
          %1190 = vmatpush.msra.mxu0 %v1179
          %1191 = vmatpush.msra.mxu0 %v1178
          %1192 = vmatpush.msra.mxu0 %v1177
          %1193 = vmatpush.msra.mxu0 %v1176
          %1194 = vmatpush.msra.mxu0 %v1175
          %1195 = vmatpush.msra.mxu0 %v1174
          %1196 = vmatpush.msra.mxu0 %v1173
          %1197 = vmatpush.msra.mxu0 %v1172
          %1198 = vmatpush.msra.mxu0 %v1171
          %1199 = vmatpush.msra.mxu0 %v1170
          %1200 = vmatpush.msra.mxu0 %v1169
          %1201 = vmatmul.f32.gmra.mxu0 %v1168
          %v1202 = vpop.f32.mrf.mxu0
          %v1203 = vadd.f32 0.0, %v1202
          %1204 = vdwg.mxu0
          %v1205 = vadd.f32 %v1146, %v1203
          %v1206 = vld [vmem:[%s967] sm:$0xff]
          %v1207 = vld [vmem:[%s959] sm:$0xff]
          %1209 = vset.pattern.permute.xlu0 0
          %1210 = vperm.xlu0 %1209, %v1207
          %v1211 = vpop.permute.xlu0 %1210
          %v1213 = vrcp.pop %v1211
          %v1214 = vmul.f32 %v1211, %v1213
          %v1215 = vsub.f32 1.0, %v1214
          %v1216 = vmul.f32 %v1213, %v1215
          %v1217 = vadd.f32 %v1213, %v1216
          %vm1218 = vweird.f32 %v1211
          %vm1219 = vweird.f32 %v1213
          %vm1220 = vmor %vm1218, %vm1219
          %v1221 = vsel %vm1220, %v1213, %v1217
          %v1222 = vand.u32 2147483647, %v1211
          %vm1223 = vcmp.eq.f32.partialorder %v1222, 8.507059e+37
          %v1224 = vand.u32 %v1211, 2147483648
          %v1225 = vor.u32 1.1754944e-38, %v1224
          %v1226 = vsel %vm1223, %v1225, %v1221
          %v1227 = vmul.f32 %v1206, %v1226
          %v1228 = vld [vmem:[%s4 + $0x100] sm:$0xff]
          %v1229 = vld [vmem:[%s4 + $0x108] sm:$0xff]
          %v1230 = vld [vmem:[%s4 + $0x110] sm:$0xff]
          %v1231 = vld [vmem:[%s4 + $0x118] sm:$0xff]
          %v1232 = vld [vmem:[%s4 + $0x120] sm:$0xff]
          %v1233 = vld [vmem:[%s4 + $0x128] sm:$0xff]
          %v1234 = vld [vmem:[%s4 + $0x130] sm:$0xff]
          %v1235 = vld [vmem:[%s4 + $0x138] sm:$0xff]
          %v1236 = vld [vmem:[%s4 + $0x140] sm:$0xff]
          %v1237 = vld [vmem:[%s4 + $0x148] sm:$0xff]
          %v1238 = vld [vmem:[%s4 + $0x150] sm:$0xff]
          %v1239 = vld [vmem:[%s4 + $0x158] sm:$0xff]
          %v1240 = vld [vmem:[%s4 + $0x160] sm:$0xff]
          %v1241 = vld [vmem:[%s4 + $0x168] sm:$0xff]
          %v1242 = vld [vmem:[%s4 + $0x170] sm:$0xff]
          %v1243 = vld [vmem:[%s4 + $0x178] sm:$0xff]
          %1244 = vmatpush.msra.mxu0 %v1243
          %1245 = vmatpush.msra.mxu0 %v1242
          %1246 = vmatpush.msra.mxu0 %v1241
          %1247 = vmatpush.msra.mxu0 %v1240
          %1248 = vmatpush.msra.mxu0 %v1239
          %1249 = vmatpush.msra.mxu0 %v1238
          %1250 = vmatpush.msra.mxu0 %v1237
          %1251 = vmatpush.msra.mxu0 %v1236
          %1252 = vmatpush.msra.mxu0 %v1235
          %1253 = vmatpush.msra.mxu0 %v1234
          %1254 = vmatpush.msra.mxu0 %v1233
          %1255 = vmatpush.msra.mxu0 %v1232
          %1256 = vmatpush.msra.mxu0 %v1231
          %1257 = vmatpush.msra.mxu0 %v1230
          %1258 = vmatpush.msra.mxu0 %v1229
          %1259 = vmatpush.msra.mxu0 %v1228
          %1260 = vmatmul.f32.gmra.mxu0 %v1227
          %v1261 = vpop.f32.mrf.mxu0
          %v1262 = vadd.f32 0.0, %v1261
          %1263 = vdwg.mxu0
          %v1264 = vadd.f32 %v1205, %v1262
          %v1265 = vld [vmem:[%s1047] sm:$0xff]
          %v1266 = vld [vmem:[%s1039] sm:$0xff]
          %1268 = vset.pattern.permute.xlu0 0
          %1269 = vperm.xlu0 %1268, %v1266
          %v1270 = vpop.permute.xlu0 %1269
          %v1272 = vrcp.pop %v1270
          %v1273 = vmul.f32 %v1270, %v1272
          %v1274 = vsub.f32 1.0, %v1273
          %v1275 = vmul.f32 %v1272, %v1274
          %v1276 = vadd.f32 %v1272, %v1275
          %vm1277 = vweird.f32 %v1270
          %vm1278 = vweird.f32 %v1272
          %vm1279 = vmor %vm1277, %vm1278
          %v1280 = vsel %vm1279, %v1272, %v1276
          %v1281 = vand.u32 2147483647, %v1270
          %vm1282 = vcmp.eq.f32.partialorder %v1281, 8.507059e+37
          %v1283 = vand.u32 %v1270, 2147483648
          %v1284 = vor.u32 1.1754944e-38, %v1283
          %v1285 = vsel %vm1282, %v1284, %v1280
          %v1286 = vmul.f32 %v1265, %v1285
          %v1287 = vld [vmem:[%s4 + $0x180] sm:$0xff]
          %v1288 = vld [vmem:[%s4 + $0x188] sm:$0xff]
          %v1289 = vld [vmem:[%s4 + $0x190] sm:$0xff]
          %v1290 = vld [vmem:[%s4 + $0x198] sm:$0xff]
          %v1291 = vld [vmem:[%s4 + $0x1a0] sm:$0xff]
          %v1292 = vld [vmem:[%s4 + $0x1a8] sm:$0xff]
          %v1293 = vld [vmem:[%s4 + $0x1b0] sm:$0xff]
          %v1294 = vld [vmem:[%s4 + $0x1b8] sm:$0xff]
          %v1295 = vld [vmem:[%s4 + $0x1c0] sm:$0xff]
          %v1296 = vld [vmem:[%s4 + $0x1c8] sm:$0xff]
          %v1297 = vld [vmem:[%s4 + $0x1d0] sm:$0xff]
          %v1298 = vld [vmem:[%s4 + $0x1d8] sm:$0xff]
          %v1299 = vld [vmem:[%s4 + $0x1e0] sm:$0xff]
          %v1300 = vld [vmem:[%s4 + $0x1e8] sm:$0xff]
          %v1301 = vld [vmem:[%s4 + $0x1f0] sm:$0xff]
          %v1302 = vld [vmem:[%s4 + $0x1f8] sm:$0xff]
          %1303 = vmatpush.msra.mxu0 %v1302
          %1304 = vmatpush.msra.mxu0 %v1301
          %1305 = vmatpush.msra.mxu0 %v1300
          %1306 = vmatpush.msra.mxu0 %v1299
          %1307 = vmatpush.msra.mxu0 %v1298
          %1308 = vmatpush.msra.mxu0 %v1297
          %1309 = vmatpush.msra.mxu0 %v1296
          %1310 = vmatpush.msra.mxu0 %v1295
          %1311 = vmatpush.msra.mxu0 %v1294
          %1312 = vmatpush.msra.mxu0 %v1293
          %1313 = vmatpush.msra.mxu0 %v1292
          %1314 = vmatpush.msra.mxu0 %v1291
          %1315 = vmatpush.msra.mxu0 %v1290
          %1316 = vmatpush.msra.mxu0 %v1289
          %1317 = vmatpush.msra.mxu0 %v1288
          %1318 = vmatpush.msra.mxu0 %v1287
          %1319 = vmatmul.f32.gmra.mxu0 %v1286
          %v1320 = vpop.f32.mrf.mxu0
          %v1321 = vadd.f32 0.0, %v1320
          %1322 = vdwg.mxu0
          %v1323 = vadd.f32 %v1264, %v1321
          %1324 = vst [vmem:[%s292] sm:$0xff] %v1323
        $region52: #{multi_head_attention.1} parent=43 // pred_fallthru
          _
        %s1325 = sand.u32 %s189, 1
        %s1326 = scalar_lea.sflag [#allocation7], %s1325
        %s1327 = sand.u32 %s189, 1
        %s1328 = smul.addr %s1327, 8
        %s1329 = scalar_lea.vmem [#allocation6], %s1328
        // Predicated region
        $region53: #{multi_head_attention.1} parent=43 // pred_check
          %p1330 = pneg %p199
        $region54: #{multi_head_attention.1} parent=43 // pred_check_branch
          %1332 = sbr.rel (%p1330) target = $region56
        $region55: #{multi_head_attention.1} parent=43 // pred_region
          %1334 = vsyncadd %s1326, 0
          %s1335 = sadd.s32 %s26, %s25
          %s1336 = smul.addr %s1335, 8
          %s1337 = scalar_lea.hbm %s6, %s1336
          %s1339 = sshll.u32 %s1329, 4
          %s1340 = int_to_ptr.vmem [resolvable:$true] %s1339
          %s1341 = sshll.u32 %s1337, 4
          %s1342 = int_to_ptr.hbm [resolvable:$true] %s1341
          %1344 = dma.vmem_to_hbm [thread:$0]  %s1340, 128, %s1342, %s1326
        $region56: #{multi_head_attention.1} parent=43 // pred_fallthru
          _
      $region44: #{multi_head_attention.1} parent=5 // pred_fallthru
        _
      %p1345 = scmp.le.s32.totalorder 2, %s15
      // Predicated region
      $region57: #{multi_head_attention.1} parent=5 // pred_check
        %p1346 = pneg %p1345
      $region58: #{multi_head_attention.1} parent=5 // pred_check_branch
        %1348 = sbr.rel (%p1346) target = $region60
      $region59: #{multi_head_attention.1} parent=5 // pred_region
        %s1349 = ssub.s32 %s15, 2
        // Predicated region
        $region61: #{multi_head_attention.1} parent=59 // pred_check
          %p1350 = pneg %p205
        $region62: #{multi_head_attention.1} parent=59 // pred_check_branch
          %1352 = sbr.rel (%p1350) target = $region64
        $region63: #{multi_head_attention.1} parent=59 // pred_region
          %s1353 = sand.u32 %s190, 1
          %s1354 = scalar_lea.sflag [#allocation7], %s1353
          %s1355 = sand.u32 %s190, 1
          %s1356 = smul.addr %s1355, 8
          %s1357 = scalar_lea.vmem [#allocation6], %s1356
          %1359 = dma.done %s1354, 128
        $region64: #{multi_head_attention.1} parent=59 // pred_fallthru
          _
      $region60: #{multi_head_attention.1} parent=5 // pred_fallthru
        _
    $region6: #{multi_head_attention.1} parent=1 // loop_footer
      %s19 = sadd.s32 1, %s15
    $region7: #{multi_head_attention.1} parent=1 // loop_footer_branch
      %14 = sbr.rel target = $region3
    $region8: #{multi_head_attention.1} parent=1 // loop_exit
      _
    %1360 = vsyncpa [#allocation7], 1
    %s1361 = scalar_lea.sflag [#allocation7], 1
    %1362 = vsyncpa %s1361, 1

</llo_original>
